<compile_context>
chip_gen: v7x
topology: tpu7x:2x2x1
jax: 0.10.0
libtpu: 0.0.40
codegen_flags: <defaults>
</compile_context>

<pallas_src>
import jax
import jax.numpy as jnp
from jax import lax
from jax.experimental import pallas as pl
from jax.experimental.pallas import tpu as pltpu

CIN = 4                    # input channels of the synthetic feature head
COUT = 512                 # 2 * 16 * 16 flat feature channels
HW = 64                    # spatial size of the feature volume (64 x 64)
NB = 16                    # 64-row bands per 1024x1024 output plane
N_GROUPS = 16              # 64-column groups per 1024-wide output row
W_OUT = N_GROUPS * HW      # 1024 output columns
ROWS_PER_STEP = 32         # row-chunk height inside a band
CHUNKS_PER_BAND = HW // ROWS_PER_STEP   # 2
LANE_TILE = 128
N_LANE_TILES = W_OUT // LANE_TILE       # 8


def _afe_kernel(wb_ref, x2_ref, o_ref, xw_ref):
    """One grid step computes one (rows_per_block, 1024) slab of an output plane.

    wb_ref: (bands_per_block, CIN+1, 1024) VMEM  rows 0..3 = per-column weights,
                                                  row 4     = per-column bias
    x2_ref: (CIN, 64, 128)  VMEM  input planes, duplicated once along lanes
    o_ref:  (bands_per_block*64, 1024) VMEM  output slab
    xw_ref: (CIN, 64, 1024) VMEM scratch   input tiled 16x along the lane axis
    """
    bands_per_block = o_ref.shape[0] // HW

    # ---- prologue: expand x from 128 to 1024 lanes with tile-aligned stores.
    # Rebuilt every grid step (robust under megacore); ~0.3 us, hides under the
    # output DMA on HBM-bound chips. x2_ref is only 128 KiB so its (constant)
    # re-fetch across grid steps is negligible.
    for i in range(CIN):
        xc2 = x2_ref[i]                                         # (64, 128)
        for g in range(N_LANE_TILES):
            xw_ref[i, :, g * LANE_TILE:(g + 1) * LANE_TILE] = xc2

    def band_body(bb, carry):
        # Hoist per-band weight/bias rows and their sublane broadcasts out of the
        # chunk loop (JAX does not CSE broadcast_in_dim).
        rows = [
            jnp.broadcast_to(wb_ref[bb, pl.ds(i, 1), :], (ROWS_PER_STEP, W_OUT))
            for i in range(CIN + 1)
        ]
        w0, w1, w2, w3, bias_b = rows

        # Two 32-row chunks per band, unrolled so the LLO scheduler can co-issue
        # vld / VALU / vst across them.
        for hh in range(CHUNKS_PER_BAND):
            xs = pl.ds(hh * ROWS_PER_STEP, ROWS_PER_STEP)       # static, aligned
            # bias folded into the first multiply-add; every op / store is
            # 1024 lanes wide.
            acc = w0 * xw_ref[0, xs, :] + bias_b
            acc = acc + w1 * xw_ref[1, xs, :]
            acc = acc + w2 * xw_ref[2, xs, :]
            acc = acc + w3 * xw_ref[3, xs, :]
            o_start = pl.multiple_of(bb * HW + hh * ROWS_PER_STEP, ROWS_PER_STEP)
            o_ref[pl.ds(o_start, ROWS_PER_STEP), :] = acc
        return carry

    lax.fori_loop(0, bands_per_block, band_body, 0, unroll=False)


def _expand_params(weight, bias):
    """Per-output-column weights with bias folded in as an extra sublane row.

    wb_exp[a, bb, i, c*64 + w] = weight[a*256 + bb*16 + c, i]   for i < CIN
    wb_exp[a, bb, CIN, c*64 + w] = bias[a*256 + bb*16 + c]
    """
    w = weight.astype(jnp.float32).reshape(2, NB, N_GROUPS, CIN)   # [a, bb, c, i]
    w = jnp.transpose(w, (0, 1, 3, 2))                             # [a, bb, i, c]
    b = bias.astype(jnp.float32).reshape(2, NB, 1, N_GROUPS)       # [a, bb, 1, c]
    wb = jnp.concatenate([w, b], axis=2)                           # (2, NB, CIN+1, 16)
    return jnp.repeat(wb, HW, axis=-1)                             # (2, NB, CIN+1, 1024)


def _default_row_blocks():
    """Row blocks per output plane: 2 on HBM-store-bound v5e/v6e, 1 elsewhere."""
    try:
        kind = jax.devices()[0].device_kind.lower()
    except Exception:
        return 1
    if ("v5 lite" in kind) or ("v5e" in kind) or ("v6" in kind):
        return 2
    return 1


def make_appearance_feature_extractor(weight, bias, row_blocks=None):
    """Build the forward fn; weight/bias expansion is done once, at init time."""
    if row_blocks is None:
        row_blocks = _default_row_blocks()
    assert NB % row_blocks == 0, row_blocks
    bands_per_block = NB // row_blocks
    rows_per_block = bands_per_block * HW

    wb_exp = _expand_params(weight, bias)          # (2, NB, CIN+1, 1024), ~640 KiB

    grid = (2, row_blocks)

    @jax.jit
    def forward(x):
        assert x.shape == (1, CIN, HW, HW)
        x_chw = x[0].astype(jnp.float32)                          # (CIN, 64, 64)
        # Single cheap (128 KiB) lane duplication so every in-kernel store of the
        # x expansion is 128-lane-tile aligned.
        x2 = jnp.concatenate([x_chw, x_chw], axis=-1)             # (CIN, 64, 128)

        out = pl.pallas_call(
            _afe_kernel,
            out_shape=jax.ShapeDtypeStruct((2, NB * HW, W_OUT), jnp.float32),
            grid=grid,
            in_specs=[
                # weights+bias for this plane / row block
                pl.BlockSpec((None, bands_per_block, CIN + 1, W_OUT),
                             lambda a, r: (a, r, 0, 0)),
                # raw (lane-doubled) input, constant across the grid
                pl.BlockSpec((CIN, HW, 2 * HW), lambda a, r: (0, 0, 0)),
            ],
            out_specs=pl.BlockSpec((None, rows_per_block, W_OUT),
                                   lambda a, r: (a, r, 0)),
            scratch_shapes=[pltpu.VMEM((CIN, HW, W_OUT), jnp.float32)],
            compiler_params=pltpu.CompilerParams(
                dimension_semantics=("parallel", "parallel"),
                vmem_limit_bytes=32 * 1024 * 1024),
        )(wb_exp, x2)

        return out[None]                                          # (1, 2, 1024, 1024)

    return forward


def reference(x, weight, bias):
    """Pure-JAX mirror of the PyTorch forward (synthetic model = 1x1 conv)."""
    # explicit broadcast-sum (exact f32) rather than einsum to avoid TPU default
    # matmul precision ambiguity in the reference itself.
    feat = (weight[:, :, None, None] * x[0][None]).sum(axis=1) + bias[:, None, None]
    out = feat.reshape(1, 2, 16, 16, 64, 64)
    out = jnp.transpose(out, (0, 1, 2, 4, 3, 5)).reshape(1, 2, 16 * 64, 64 * 16)
    return out


if __name__ == "__main__":
    key = jax.random.PRNGKey(0)
    kx, kw, kb = jax.random.split(key, 3)

    x = jax.random.normal(kx, (1, CIN, HW, HW), dtype=jnp.float32)
    weight = jax.random.normal(kw, (COUT, CIN), dtype=jnp.float32) * 0.1
    bias = jax.random.normal(kb, (COUT,), dtype=jnp.float32) * 0.01

    forward = make_appearance_feature_extractor(weight, bias)
    out = jax.block_until_ready(forward(x))

    ref = jax.block_until_ready(reference(x, weight, bias))
    assert out.shape == (1, 2, 1024, 1024), out.shape
    assert jnp.allclose(out, ref, rtol=1e-5, atol=1e-4), (
        float(jnp.max(jnp.abs(out - ref))))

    print("KERNEL_OK")
</pallas_src>

<mosaic_0001>
module attributes {stable_mosaic.version = 11 : i64} {
  func.func @_afe_kernel(%arg0: i32, %arg1: i32, %arg2: memref<1x16x5x1024xf32, #tpu.memory_space<vmem>>, %arg3: memref<4x64x128xf32, #tpu.memory_space<vmem>>, %arg4: memref<1x1024x1024xf32, #tpu.memory_space<vmem>>, %arg5: memref<4x64x1024xf32, #tpu.memory_space<vmem>>) attributes {dimension_semantics = [#tpu.dimension_semantics<parallel>, #tpu.dimension_semantics<parallel>], iteration_bounds = array<i64: 2, 1>, scalar_prefetch = 0 : i64, scratch_operands = 1 : i64, tpu.core_type = #tpu.core_type<tc>, window_params = [{transform_indices = @transform_0, window_bounds = array<i64: 1, 16, 5, 1024>}, {pipeline_mode = #tpu.pipeline_mode<synchronous>, transform_indices = @transform_1, window_bounds = array<i64: 4, 64, 128>}, {transform_indices = @transform_2, window_bounds = array<i64: 1, 1024, 1024>}]} {
    %c0 = arith.constant 0 : index
    %c0_0 = arith.constant 0 : index
    %c0_1 = arith.constant 0 : index
    %0 = vector.load %arg3[%c0, %c0_0, %c0_1] : memref<4x64x128xf32, #tpu.memory_space<vmem>>, vector<1x64x128xf32>
    %1 = vector.shape_cast %0 : vector<1x64x128xf32> to vector<64x128xf32>
    %c0_2 = arith.constant 0 : index
    %c0_3 = arith.constant 0 : index
    %c0_4 = arith.constant 0 : index
    %2 = vector.load %arg5[%c0_2, %c0_3, %c0_4] : memref<4x64x1024xf32, #tpu.memory_space<vmem>>, vector<1x64x128xf32>
    %3 = vector.shape_cast %2 : vector<1x64x128xf32> to vector<64x128xf32>
    %4 = vector.shape_cast %1 : vector<64x128xf32> to vector<1x64x128xf32>
    tpu.vector_store %arg5[%c0_2, %c0_3, %c0_4], %4 {strides = array<i32>} : memref<4x64x1024xf32, #tpu.memory_space<vmem>>, vector<1x64x128xf32>,
    %c0_5 = arith.constant 0 : index
    %c0_6 = arith.constant 0 : index
    %c128 = arith.constant 128 : index
    %5 = vector.load %arg5[%c0_5, %c0_6, %c128] : memref<4x64x1024xf32, #tpu.memory_space<vmem>>, vector<1x64x128xf32>
    %6 = vector.shape_cast %5 : vector<1x64x128xf32> to vector<64x128xf32>
    %7 = vector.shape_cast %1 : vector<64x128xf32> to vector<1x64x128xf32>
    tpu.vector_store %arg5[%c0_5, %c0_6, %c128], %7 {strides = array<i32>} : memref<4x64x1024xf32, #tpu.memory_space<vmem>>, vector<1x64x128xf32>,
    %c0_7 = arith.constant 0 : index
    %c0_8 = arith.constant 0 : index
    %c256 = arith.constant 256 : index
    %8 = vector.load %arg5[%c0_7, %c0_8, %c256] : memref<4x64x1024xf32, #tpu.memory_space<vmem>>, vector<1x64x128xf32>
    %9 = vector.shape_cast %8 : vector<1x64x128xf32> to vector<64x128xf32>
    %10 = vector.shape_cast %1 : vector<64x128xf32> to vector<1x64x128xf32>
    tpu.vector_store %arg5[%c0_7, %c0_8, %c256], %10 {strides = array<i32>} : memref<4x64x1024xf32, #tpu.memory_space<vmem>>, vector<1x64x128xf32>,
    %c0_9 = arith.constant 0 : index
    %c0_10 = arith.constant 0 : index
    %c384 = arith.constant 384 : index
    %11 = vector.load %arg5[%c0_9, %c0_10, %c384] : memref<4x64x1024xf32, #tpu.memory_space<vmem>>, vector<1x64x128xf32>
    %12 = vector.shape_cast %11 : vector<1x64x128xf32> to vector<64x128xf32>
    %13 = vector.shape_cast %1 : vector<64x128xf32> to vector<1x64x128xf32>
    tpu.vector_store %arg5[%c0_9, %c0_10, %c384], %13 {strides = array<i32>} : memref<4x64x1024xf32, #tpu.memory_space<vmem>>, vector<1x64x128xf32>,
    %c0_11 = arith.constant 0 : index
    %c0_12 = arith.constant 0 : index
    %c512 = arith.constant 512 : index
    %14 = vector.load %arg5[%c0_11, %c0_12, %c512] : memref<4x64x1024xf32, #tpu.memory_space<vmem>>, vector<1x64x128xf32>
    %15 = vector.shape_cast %14 : vector<1x64x128xf32> to vector<64x128xf32>
    %16 = vector.shape_cast %1 : vector<64x128xf32> to vector<1x64x128xf32>
    tpu.vector_store %arg5[%c0_11, %c0_12, %c512], %16 {strides = array<i32>} : memref<4x64x1024xf32, #tpu.memory_space<vmem>>, vector<1x64x128xf32>,
    %c0_13 = arith.constant 0 : index
    %c0_14 = arith.constant 0 : index
    %c640 = arith.constant 640 : index
    %17 = vector.load %arg5[%c0_13, %c0_14, %c640] : memref<4x64x1024xf32, #tpu.memory_space<vmem>>, vector<1x64x128xf32>
    %18 = vector.shape_cast %17 : vector<1x64x128xf32> to vector<64x128xf32>
    %19 = vector.shape_cast %1 : vector<64x128xf32> to vector<1x64x128xf32>
    tpu.vector_store %arg5[%c0_13, %c0_14, %c640], %19 {strides = array<i32>} : memref<4x64x1024xf32, #tpu.memory_space<vmem>>, vector<1x64x128xf32>,
    %c0_15 = arith.constant 0 : index
    %c0_16 = arith.constant 0 : index
    %c768 = arith.constant 768 : index
    %20 = vector.load %arg5[%c0_15, %c0_16, %c768] : memref<4x64x1024xf32, #tpu.memory_space<vmem>>, vector<1x64x128xf32>
    %21 = vector.shape_cast %20 : vector<1x64x128xf32> to vector<64x128xf32>
    %22 = vector.shape_cast %1 : vector<64x128xf32> to vector<1x64x128xf32>
    tpu.vector_store %arg5[%c0_15, %c0_16, %c768], %22 {strides = array<i32>} : memref<4x64x1024xf32, #tpu.memory_space<vmem>>, vector<1x64x128xf32>,
    %c0_17 = arith.constant 0 : index
    %c0_18 = arith.constant 0 : index
    %c896 = arith.constant 896 : index
    %23 = vector.load %arg5[%c0_17, %c0_18, %c896] : memref<4x64x1024xf32, #tpu.memory_space<vmem>>, vector<1x64x128xf32>
    %24 = vector.shape_cast %23 : vector<1x64x128xf32> to vector<64x128xf32>
    %25 = vector.shape_cast %1 : vector<64x128xf32> to vector<1x64x128xf32>
    tpu.vector_store %arg5[%c0_17, %c0_18, %c896], %25 {strides = array<i32>} : memref<4x64x1024xf32, #tpu.memory_space<vmem>>, vector<1x64x128xf32>,
    %c1 = arith.constant 1 : index
    %c0_19 = arith.constant 0 : index
    %c0_20 = arith.constant 0 : index
    %26 = vector.load %arg3[%c1, %c0_19, %c0_20] : memref<4x64x128xf32, #tpu.memory_space<vmem>>, vector<1x64x128xf32>
    %27 = vector.shape_cast %26 : vector<1x64x128xf32> to vector<64x128xf32>
    %c1_21 = arith.constant 1 : index
    %c0_22 = arith.constant 0 : index
    %c0_23 = arith.constant 0 : index
    %28 = vector.load %arg5[%c1_21, %c0_22, %c0_23] : memref<4x64x1024xf32, #tpu.memory_space<vmem>>, vector<1x64x128xf32>
    %29 = vector.shape_cast %28 : vector<1x64x128xf32> to vector<64x128xf32>
    %30 = vector.shape_cast %27 : vector<64x128xf32> to vector<1x64x128xf32>
    tpu.vector_store %arg5[%c1_21, %c0_22, %c0_23], %30 {strides = array<i32>} : memref<4x64x1024xf32, #tpu.memory_space<vmem>>, vector<1x64x128xf32>,
    %c1_24 = arith.constant 1 : index
    %c0_25 = arith.constant 0 : index
    %c128_26 = arith.constant 128 : index
    %31 = vector.load %arg5[%c1_24, %c0_25, %c128_26] : memref<4x64x1024xf32, #tpu.memory_space<vmem>>, vector<1x64x128xf32>
    %32 = vector.shape_cast %31 : vector<1x64x128xf32> to vector<64x128xf32>
    %33 = vector.shape_cast %27 : vector<64x128xf32> to vector<1x64x128xf32>
    tpu.vector_store %arg5[%c1_24, %c0_25, %c128_26], %33 {strides = array<i32>} : memref<4x64x1024xf32, #tpu.memory_space<vmem>>, vector<1x64x128xf32>,
    %c1_27 = arith.constant 1 : index
    %c0_28 = arith.constant 0 : index
    %c256_29 = arith.constant 256 : index
    %34 = vector.load %arg5[%c1_27, %c0_28, %c256_29] : memref<4x64x1024xf32, #tpu.memory_space<vmem>>, vector<1x64x128xf32>
    %35 = vector.shape_cast %34 : vector<1x64x128xf32> to vector<64x128xf32>
    %36 = vector.shape_cast %27 : vector<64x128xf32> to vector<1x64x128xf32>
    tpu.vector_store %arg5[%c1_27, %c0_28, %c256_29], %36 {strides = array<i32>} : memref<4x64x1024xf32, #tpu.memory_space<vmem>>, vector<1x64x128xf32>,
    %c1_30 = arith.constant 1 : index
    %c0_31 = arith.constant 0 : index
    %c384_32 = arith.constant 384 : index
    %37 = vector.load %arg5[%c1_30, %c0_31, %c384_32] : memref<4x64x1024xf32, #tpu.memory_space<vmem>>, vector<1x64x128xf32>
    %38 = vector.shape_cast %37 : vector<1x64x128xf32> to vector<64x128xf32>
    %39 = vector.shape_cast %27 : vector<64x128xf32> to vector<1x64x128xf32>
    tpu.vector_store %arg5[%c1_30, %c0_31, %c384_32], %39 {strides = array<i32>} : memref<4x64x1024xf32, #tpu.memory_space<vmem>>, vector<1x64x128xf32>,
    %c1_33 = arith.constant 1 : index
    %c0_34 = arith.constant 0 : index
    %c512_35 = arith.constant 512 : index
    %40 = vector.load %arg5[%c1_33, %c0_34, %c512_35] : memref<4x64x1024xf32, #tpu.memory_space<vmem>>, vector<1x64x128xf32>
    %41 = vector.shape_cast %40 : vector<1x64x128xf32> to vector<64x128xf32>
    %42 = vector.shape_cast %27 : vector<64x128xf32> to vector<1x64x128xf32>
    tpu.vector_store %arg5[%c1_33, %c0_34, %c512_35], %42 {strides = array<i32>} : memref<4x64x1024xf32, #tpu.memory_space<vmem>>, vector<1x64x128xf32>,
    %c1_36 = arith.constant 1 : index
    %c0_37 = arith.constant 0 : index
    %c640_38 = arith.constant 640 : index
    %43 = vector.load %arg5[%c1_36, %c0_37, %c640_38] : memref<4x64x1024xf32, #tpu.memory_space<vmem>>, vector<1x64x128xf32>
    %44 = vector.shape_cast %43 : vector<1x64x128xf32> to vector<64x128xf32>
    %45 = vector.shape_cast %27 : vector<64x128xf32> to vector<1x64x128xf32>
    tpu.vector_store %arg5[%c1_36, %c0_37, %c640_38], %45 {strides = array<i32>} : memref<4x64x1024xf32, #tpu.memory_space<vmem>>, vector<1x64x128xf32>,
    %c1_39 = arith.constant 1 : index
    %c0_40 = arith.constant 0 : index
    %c768_41 = arith.constant 768 : index
    %46 = vector.load %arg5[%c1_39, %c0_40, %c768_41] : memref<4x64x1024xf32, #tpu.memory_space<vmem>>, vector<1x64x128xf32>
    %47 = vector.shape_cast %46 : vector<1x64x128xf32> to vector<64x128xf32>
    %48 = vector.shape_cast %27 : vector<64x128xf32> to vector<1x64x128xf32>
    tpu.vector_store %arg5[%c1_39, %c0_40, %c768_41], %48 {strides = array<i32>} : memref<4x64x1024xf32, #tpu.memory_space<vmem>>, vector<1x64x128xf32>,
    %c1_42 = arith.constant 1 : index
    %c0_43 = arith.constant 0 : index
    %c896_44 = arith.constant 896 : index
    %49 = vector.load %arg5[%c1_42, %c0_43, %c896_44] : memref<4x64x1024xf32, #tpu.memory_space<vmem>>, vector<1x64x128xf32>
    %50 = vector.shape_cast %49 : vector<1x64x128xf32> to vector<64x128xf32>
    %51 = vector.shape_cast %27 : vector<64x128xf32> to vector<1x64x128xf32>
    tpu.vector_store %arg5[%c1_42, %c0_43, %c896_44], %51 {strides = array<i32>} : memref<4x64x1024xf32, #tpu.memory_space<vmem>>, vector<1x64x128xf32>,
    %c2 = arith.constant 2 : index
    %c0_45 = arith.constant 0 : index
    %c0_46 = arith.constant 0 : index
    %52 = vector.load %arg3[%c2, %c0_45, %c0_46] : memref<4x64x128xf32, #tpu.memory_space<vmem>>, vector<1x64x128xf32>
    %53 = vector.shape_cast %52 : vector<1x64x128xf32> to vector<64x128xf32>
    %c2_47 = arith.constant 2 : index
    %c0_48 = arith.constant 0 : index
    %c0_49 = arith.constant 0 : index
    %54 = vector.load %arg5[%c2_47, %c0_48, %c0_49] : memref<4x64x1024xf32, #tpu.memory_space<vmem>>, vector<1x64x128xf32>
    %55 = vector.shape_cast %54 : vector<1x64x128xf32> to vector<64x128xf32>
    %56 = vector.shape_cast %53 : vector<64x128xf32> to vector<1x64x128xf32>
    tpu.vector_store %arg5[%c2_47, %c0_48, %c0_49], %56 {strides = array<i32>} : memref<4x64x1024xf32, #tpu.memory_space<vmem>>, vector<1x64x128xf32>,
    %c2_50 = arith.constant 2 : index
    %c0_51 = arith.constant 0 : index
    %c128_52 = arith.constant 128 : index
    %57 = vector.load %arg5[%c2_50, %c0_51, %c128_52] : memref<4x64x1024xf32, #tpu.memory_space<vmem>>, vector<1x64x128xf32>
    %58 = vector.shape_cast %57 : vector<1x64x128xf32> to vector<64x128xf32>
    %59 = vector.shape_cast %53 : vector<64x128xf32> to vector<1x64x128xf32>
    tpu.vector_store %arg5[%c2_50, %c0_51, %c128_52], %59 {strides = array<i32>} : memref<4x64x1024xf32, #tpu.memory_space<vmem>>, vector<1x64x128xf32>,
    %c2_53 = arith.constant 2 : index
    %c0_54 = arith.constant 0 : index
    %c256_55 = arith.constant 256 : index
    %60 = vector.load %arg5[%c2_53, %c0_54, %c256_55] : memref<4x64x1024xf32, #tpu.memory_space<vmem>>, vector<1x64x128xf32>
    %61 = vector.shape_cast %60 : vector<1x64x128xf32> to vector<64x128xf32>
    %62 = vector.shape_cast %53 : vector<64x128xf32> to vector<1x64x128xf32>
    tpu.vector_store %arg5[%c2_53, %c0_54, %c256_55], %62 {strides = array<i32>} : memref<4x64x1024xf32, #tpu.memory_space<vmem>>, vector<1x64x128xf32>,
    %c2_56 = arith.constant 2 : index
    %c0_57 = arith.constant 0 : index
    %c384_58 = arith.constant 384 : index
    %63 = vector.load %arg5[%c2_56, %c0_57, %c384_58] : memref<4x64x1024xf32, #tpu.memory_space<vmem>>, vector<1x64x128xf32>
    %64 = vector.shape_cast %63 : vector<1x64x128xf32> to vector<64x128xf32>
    %65 = vector.shape_cast %53 : vector<64x128xf32> to vector<1x64x128xf32>
    tpu.vector_store %arg5[%c2_56, %c0_57, %c384_58], %65 {strides = array<i32>} : memref<4x64x1024xf32, #tpu.memory_space<vmem>>, vector<1x64x128xf32>,
    %c2_59 = arith.constant 2 : index
    %c0_60 = arith.constant 0 : index
    %c512_61 = arith.constant 512 : index
    %66 = vector.load %arg5[%c2_59, %c0_60, %c512_61] : memref<4x64x1024xf32, #tpu.memory_space<vmem>>, vector<1x64x128xf32>
    %67 = vector.shape_cast %66 : vector<1x64x128xf32> to vector<64x128xf32>
    %68 = vector.shape_cast %53 : vector<64x128xf32> to vector<1x64x128xf32>
    tpu.vector_store %arg5[%c2_59, %c0_60, %c512_61], %68 {strides = array<i32>} : memref<4x64x1024xf32, #tpu.memory_space<vmem>>, vector<1x64x128xf32>,
    %c2_62 = arith.constant 2 : index
    %c0_63 = arith.constant 0 : index
    %c640_64 = arith.constant 640 : index
    %69 = vector.load %arg5[%c2_62, %c0_63, %c640_64] : memref<4x64x1024xf32, #tpu.memory_space<vmem>>, vector<1x64x128xf32>
    %70 = vector.shape_cast %69 : vector<1x64x128xf32> to vector<64x128xf32>
    %71 = vector.shape_cast %53 : vector<64x128xf32> to vector<1x64x128xf32>
    tpu.vector_store %arg5[%c2_62, %c0_63, %c640_64], %71 {strides = array<i32>} : memref<4x64x1024xf32, #tpu.memory_space<vmem>>, vector<1x64x128xf32>,
    %c2_65 = arith.constant 2 : index
    %c0_66 = arith.constant 0 : index
    %c768_67 = arith.constant 768 : index
    %72 = vector.load %arg5[%c2_65, %c0_66, %c768_67] : memref<4x64x1024xf32, #tpu.memory_space<vmem>>, vector<1x64x128xf32>
    %73 = vector.shape_cast %72 : vector<1x64x128xf32> to vector<64x128xf32>
    %74 = vector.shape_cast %53 : vector<64x128xf32> to vector<1x64x128xf32>
    tpu.vector_store %arg5[%c2_65, %c0_66, %c768_67], %74 {strides = array<i32>} : memref<4x64x1024xf32, #tpu.memory_space<vmem>>, vector<1x64x128xf32>,
    %c2_68 = arith.constant 2 : index
    %c0_69 = arith.constant 0 : index
    %c896_70 = arith.constant 896 : index
    %75 = vector.load %arg5[%c2_68, %c0_69, %c896_70] : memref<4x64x1024xf32, #tpu.memory_space<vmem>>, vector<1x64x128xf32>
    %76 = vector.shape_cast %75 : vector<1x64x128xf32> to vector<64x128xf32>
    %77 = vector.shape_cast %53 : vector<64x128xf32> to vector<1x64x128xf32>
    tpu.vector_store %arg5[%c2_68, %c0_69, %c896_70], %77 {strides = array<i32>} : memref<4x64x1024xf32, #tpu.memory_space<vmem>>, vector<1x64x128xf32>,
    %c3 = arith.constant 3 : index
    %c0_71 = arith.constant 0 : index
    %c0_72 = arith.constant 0 : index
    %78 = vector.load %arg3[%c3, %c0_71, %c0_72] : memref<4x64x128xf32, #tpu.memory_space<vmem>>, vector<1x64x128xf32>
    %79 = vector.shape_cast %78 : vector<1x64x128xf32> to vector<64x128xf32>
    %c3_73 = arith.constant 3 : index
    %c0_74 = arith.constant 0 : index
    %c0_75 = arith.constant 0 : index
    %80 = vector.load %arg5[%c3_73, %c0_74, %c0_75] : memref<4x64x1024xf32, #tpu.memory_space<vmem>>, vector<1x64x128xf32>
    %81 = vector.shape_cast %80 : vector<1x64x128xf32> to vector<64x128xf32>
    %82 = vector.shape_cast %79 : vector<64x128xf32> to vector<1x64x128xf32>
    tpu.vector_store %arg5[%c3_73, %c0_74, %c0_75], %82 {strides = array<i32>} : memref<4x64x1024xf32, #tpu.memory_space<vmem>>, vector<1x64x128xf32>,
    %c3_76 = arith.constant 3 : index
    %c0_77 = arith.constant 0 : index
    %c128_78 = arith.constant 128 : index
    %83 = vector.load %arg5[%c3_76, %c0_77, %c128_78] : memref<4x64x1024xf32, #tpu.memory_space<vmem>>, vector<1x64x128xf32>
    %84 = vector.shape_cast %83 : vector<1x64x128xf32> to vector<64x128xf32>
    %85 = vector.shape_cast %79 : vector<64x128xf32> to vector<1x64x128xf32>
    tpu.vector_store %arg5[%c3_76, %c0_77, %c128_78], %85 {strides = array<i32>} : memref<4x64x1024xf32, #tpu.memory_space<vmem>>, vector<1x64x128xf32>,
    %c3_79 = arith.constant 3 : index
    %c0_80 = arith.constant 0 : index
    %c256_81 = arith.constant 256 : index
    %86 = vector.load %arg5[%c3_79, %c0_80, %c256_81] : memref<4x64x1024xf32, #tpu.memory_space<vmem>>, vector<1x64x128xf32>
    %87 = vector.shape_cast %86 : vector<1x64x128xf32> to vector<64x128xf32>
    %88 = vector.shape_cast %79 : vector<64x128xf32> to vector<1x64x128xf32>
    tpu.vector_store %arg5[%c3_79, %c0_80, %c256_81], %88 {strides = array<i32>} : memref<4x64x1024xf32, #tpu.memory_space<vmem>>, vector<1x64x128xf32>,
    %c3_82 = arith.constant 3 : index
    %c0_83 = arith.constant 0 : index
    %c384_84 = arith.constant 384 : index
    %89 = vector.load %arg5[%c3_82, %c0_83, %c384_84] : memref<4x64x1024xf32, #tpu.memory_space<vmem>>, vector<1x64x128xf32>
    %90 = vector.shape_cast %89 : vector<1x64x128xf32> to vector<64x128xf32>
    %91 = vector.shape_cast %79 : vector<64x128xf32> to vector<1x64x128xf32>
    tpu.vector_store %arg5[%c3_82, %c0_83, %c384_84], %91 {strides = array<i32>} : memref<4x64x1024xf32, #tpu.memory_space<vmem>>, vector<1x64x128xf32>,
    %c3_85 = arith.constant 3 : index
    %c0_86 = arith.constant 0 : index
    %c512_87 = arith.constant 512 : index
    %92 = vector.load %arg5[%c3_85, %c0_86, %c512_87] : memref<4x64x1024xf32, #tpu.memory_space<vmem>>, vector<1x64x128xf32>
    %93 = vector.shape_cast %92 : vector<1x64x128xf32> to vector<64x128xf32>
    %94 = vector.shape_cast %79 : vector<64x128xf32> to vector<1x64x128xf32>
    tpu.vector_store %arg5[%c3_85, %c0_86, %c512_87], %94 {strides = array<i32>} : memref<4x64x1024xf32, #tpu.memory_space<vmem>>, vector<1x64x128xf32>,
    %c3_88 = arith.constant 3 : index
    %c0_89 = arith.constant 0 : index
    %c640_90 = arith.constant 640 : index
    %95 = vector.load %arg5[%c3_88, %c0_89, %c640_90] : memref<4x64x1024xf32, #tpu.memory_space<vmem>>, vector<1x64x128xf32>
    %96 = vector.shape_cast %95 : vector<1x64x128xf32> to vector<64x128xf32>
    %97 = vector.shape_cast %79 : vector<64x128xf32> to vector<1x64x128xf32>
    tpu.vector_store %arg5[%c3_88, %c0_89, %c640_90], %97 {strides = array<i32>} : memref<4x64x1024xf32, #tpu.memory_space<vmem>>, vector<1x64x128xf32>,
    %c3_91 = arith.constant 3 : index
    %c0_92 = arith.constant 0 : index
    %c768_93 = arith.constant 768 : index
    %98 = vector.load %arg5[%c3_91, %c0_92, %c768_93] : memref<4x64x1024xf32, #tpu.memory_space<vmem>>, vector<1x64x128xf32>
    %99 = vector.shape_cast %98 : vector<1x64x128xf32> to vector<64x128xf32>
    %100 = vector.shape_cast %79 : vector<64x128xf32> to vector<1x64x128xf32>
    tpu.vector_store %arg5[%c3_91, %c0_92, %c768_93], %100 {strides = array<i32>} : memref<4x64x1024xf32, #tpu.memory_space<vmem>>, vector<1x64x128xf32>,
    %c3_94 = arith.constant 3 : index
    %c0_95 = arith.constant 0 : index
    %c896_96 = arith.constant 896 : index
    %101 = vector.load %arg5[%c3_94, %c0_95, %c896_96] : memref<4x64x1024xf32, #tpu.memory_space<vmem>>, vector<1x64x128xf32>
    %102 = vector.shape_cast %101 : vector<1x64x128xf32> to vector<64x128xf32>
    %103 = vector.shape_cast %79 : vector<64x128xf32> to vector<1x64x128xf32>
    tpu.vector_store %arg5[%c3_94, %c0_95, %c896_96], %103 {strides = array<i32>} : memref<4x64x1024xf32, #tpu.memory_space<vmem>>, vector<1x64x128xf32>,
    %c0_i32 = arith.constant 0 : i32
    %c16_i32 = arith.constant 16 : i32
    %104 = arith.addi %c0_i32, %c16_i32 : i32
    %c1_i32 = arith.constant 1 : i32
    scf.for %arg6 = %c0_i32 to %104 step %c1_i32  : i32 {
      %c0_98 = arith.constant 0 : index
      %105 = arith.index_cast %arg6 : i32 to index
      %c0_99 = arith.constant 0 : index
      %c0_100 = arith.constant 0 : index
      %106 = vector.load %arg2[%c0_98, %105, %c0_99, %c0_100] : memref<1x16x5x1024xf32, #tpu.memory_space<vmem>>, vector<1x1x1x1024xf32>
      %107 = vector.shape_cast %106 : vector<1x1x1x1024xf32> to vector<1x1024xf32>
      %108 = vector.shape_cast %107 : vector<1x1024xf32> to vector<1x1024xf32>
      %109 = vector.broadcast %108 : vector<1x1024xf32> to vector<32x1024xf32>
      %c0_101 = arith.constant 0 : index
      %110 = arith.index_cast %arg6 : i32 to index
      %c1_102 = arith.constant 1 : index
      %c0_103 = arith.constant 0 : index
      %111 = vector.load %arg2[%c0_101, %110, %c1_102, %c0_103] : memref<1x16x5x1024xf32, #tpu.memory_space<vmem>>, vector<1x1x1x1024xf32>
      %112 = vector.shape_cast %111 : vector<1x1x1x1024xf32> to vector<1x1024xf32>
      %113 = vector.shape_cast %112 : vector<1x1024xf32> to vector<1x1024xf32>
      %114 = vector.broadcast %113 : vector<1x1024xf32> to vector<32x1024xf32>
      %c0_104 = arith.constant 0 : index
      %115 = arith.index_cast %arg6 : i32 to index
      %c2_105 = arith.constant 2 : index
      %c0_106 = arith.constant 0 : index
      %116 = vector.load %arg2[%c0_104, %115, %c2_105, %c0_106] : memref<1x16x5x1024xf32, #tpu.memory_space<vmem>>, vector<1x1x1x1024xf32>
      %117 = vector.shape_cast %116 : vector<1x1x1x1024xf32> to vector<1x1024xf32>
      %118 = vector.shape_cast %117 : vector<1x1024xf32> to vector<1x1024xf32>
      %119 = vector.broadcast %118 : vector<1x1024xf32> to vector<32x1024xf32>
      %c0_107 = arith.constant 0 : index
      %120 = arith.index_cast %arg6 : i32 to index
      %c3_108 = arith.constant 3 : index
      %c0_109 = arith.constant 0 : index
      %121 = vector.load %arg2[%c0_107, %120, %c3_108, %c0_109] : memref<1x16x5x1024xf32, #tpu.memory_space<vmem>>, vector<1x1x1x1024xf32>
      %122 = vector.shape_cast %121 : vector<1x1x1x1024xf32> to vector<1x1024xf32>
      %123 = vector.shape_cast %122 : vector<1x1024xf32> to vector<1x1024xf32>
      %124 = vector.broadcast %123 : vector<1x1024xf32> to vector<32x1024xf32>
      %c0_110 = arith.constant 0 : index
      %125 = arith.index_cast %arg6 : i32 to index
      %c4 = arith.constant 4 : index
      %c0_111 = arith.constant 0 : index
      %126 = vector.load %arg2[%c0_110, %125, %c4, %c0_111] : memref<1x16x5x1024xf32, #tpu.memory_space<vmem>>, vector<1x1x1x1024xf32>
      %127 = vector.shape_cast %126 : vector<1x1x1x1024xf32> to vector<1x1024xf32>
      %128 = vector.shape_cast %127 : vector<1x1024xf32> to vector<1x1024xf32>
      %129 = vector.broadcast %128 : vector<1x1024xf32> to vector<32x1024xf32>
      %c0_112 = arith.constant 0 : index
      %c0_113 = arith.constant 0 : index
      %c0_114 = arith.constant 0 : index
      %130 = vector.load %arg5[%c0_112, %c0_113, %c0_114] : memref<4x64x1024xf32, #tpu.memory_space<vmem>>, vector<1x32x1024xf32>
      %131 = vector.shape_cast %130 : vector<1x32x1024xf32> to vector<32x1024xf32>
      %132 = arith.mulf %109, %131 : vector<32x1024xf32>
      %133 = arith.addf %132, %129 : vector<32x1024xf32>
      %c1_115 = arith.constant 1 : index
      %c0_116 = arith.constant 0 : index
      %c0_117 = arith.constant 0 : index
      %134 = vector.load %arg5[%c1_115, %c0_116, %c0_117] : memref<4x64x1024xf32, #tpu.memory_space<vmem>>, vector<1x32x1024xf32>
      %135 = vector.shape_cast %134 : vector<1x32x1024xf32> to vector<32x1024xf32>
      %136 = arith.mulf %114, %135 : vector<32x1024xf32>
      %137 = arith.addf %133, %136 : vector<32x1024xf32>
      %c2_118 = arith.constant 2 : index
      %c0_119 = arith.constant 0 : index
      %c0_120 = arith.constant 0 : index
      %138 = vector.load %arg5[%c2_118, %c0_119, %c0_120] : memref<4x64x1024xf32, #tpu.memory_space<vmem>>, vector<1x32x1024xf32>
      %139 = vector.shape_cast %138 : vector<1x32x1024xf32> to vector<32x1024xf32>
      %140 = arith.mulf %119, %139 : vector<32x1024xf32>
      %141 = arith.addf %137, %140 : vector<32x1024xf32>
      %c3_121 = arith.constant 3 : index
      %c0_122 = arith.constant 0 : index
      %c0_123 = arith.constant 0 : index
      %142 = vector.load %arg5[%c3_121, %c0_122, %c0_123] : memref<4x64x1024xf32, #tpu.memory_space<vmem>>, vector<1x32x1024xf32>
      %143 = vector.shape_cast %142 : vector<1x32x1024xf32> to vector<32x1024xf32>
      %144 = arith.mulf %124, %143 : vector<32x1024xf32>
      %145 = arith.addf %141, %144 : vector<32x1024xf32>
      %c64_i32 = arith.constant 64 : i32
      %146 = arith.muli %arg6, %c64_i32 : i32
      %c0_i32_124 = arith.constant 0 : i32
      %147 = arith.addi %146, %c0_i32_124 : i32
      %148 = tpu.assume_multiple %147, 32 : i32
      %c0_125 = arith.constant 0 : index
      %149 = arith.index_cast %148 : i32 to index
      %c0_126 = arith.constant 0 : index
      %150 = vector.load %arg4[%c0_125, %149, %c0_126] : memref<1x1024x1024xf32, #tpu.memory_space<vmem>>, vector<1x32x1024xf32>
      %151 = vector.shape_cast %150 : vector<1x32x1024xf32> to vector<32x1024xf32>
      %152 = vector.shape_cast %145 : vector<32x1024xf32> to vector<1x32x1024xf32>
      tpu.vector_store %arg4[%c0_125, %149, %c0_126], %152 {strides = array<i32>} : memref<1x1024x1024xf32, #tpu.memory_space<vmem>>, vector<1x32x1024xf32>,
      %c0_127 = arith.constant 0 : index
      %c32 = arith.constant 32 : index
      %c0_128 = arith.constant 0 : index
      %153 = vector.load %arg5[%c0_127, %c32, %c0_128] : memref<4x64x1024xf32, #tpu.memory_space<vmem>>, vector<1x32x1024xf32>
      %154 = vector.shape_cast %153 : vector<1x32x1024xf32> to vector<32x1024xf32>
      %155 = arith.mulf %109, %154 : vector<32x1024xf32>
      %156 = arith.addf %155, %129 : vector<32x1024xf32>
      %c1_129 = arith.constant 1 : index
      %c32_130 = arith.constant 32 : index
      %c0_131 = arith.constant 0 : index
      %157 = vector.load %arg5[%c1_129, %c32_130, %c0_131] : memref<4x64x1024xf32, #tpu.memory_space<vmem>>, vector<1x32x1024xf32>
      %158 = vector.shape_cast %157 : vector<1x32x1024xf32> to vector<32x1024xf32>
      %159 = arith.mulf %114, %158 : vector<32x1024xf32>
      %160 = arith.addf %156, %159 : vector<32x1024xf32>
      %c2_132 = arith.constant 2 : index
      %c32_133 = arith.constant 32 : index
      %c0_134 = arith.constant 0 : index
      %161 = vector.load %arg5[%c2_132, %c32_133, %c0_134] : memref<4x64x1024xf32, #tpu.memory_space<vmem>>, vector<1x32x1024xf32>
      %162 = vector.shape_cast %161 : vector<1x32x1024xf32> to vector<32x1024xf32>
      %163 = arith.mulf %119, %162 : vector<32x1024xf32>
      %164 = arith.addf %160, %163 : vector<32x1024xf32>
      %c3_135 = arith.constant 3 : index
      %c32_136 = arith.constant 32 : index
      %c0_137 = arith.constant 0 : index
      %165 = vector.load %arg5[%c3_135, %c32_136, %c0_137] : memref<4x64x1024xf32, #tpu.memory_space<vmem>>, vector<1x32x1024xf32>
      %166 = vector.shape_cast %165 : vector<1x32x1024xf32> to vector<32x1024xf32>
      %167 = arith.mulf %124, %166 : vector<32x1024xf32>
      %168 = arith.addf %164, %167 : vector<32x1024xf32>
      %c64_i32_138 = arith.constant 64 : i32
      %169 = arith.muli %arg6, %c64_i32_138 : i32
      %c32_i32 = arith.constant 32 : i32
      %170 = arith.addi %169, %c32_i32 : i32
      %171 = tpu.assume_multiple %170, 32 : i32
      %c0_139 = arith.constant 0 : index
      %172 = arith.index_cast %171 : i32 to index
      %c0_140 = arith.constant 0 : index
      %173 = vector.load %arg4[%c0_139, %172, %c0_140] : memref<1x1024x1024xf32, #tpu.memory_space<vmem>>, vector<1x32x1024xf32>
      %174 = vector.shape_cast %173 : vector<1x32x1024xf32> to vector<32x1024xf32>
      %175 = vector.shape_cast %168 : vector<32x1024xf32> to vector<1x32x1024xf32>
      tpu.vector_store %arg4[%c0_139, %172, %c0_140], %175 {strides = array<i32>} : memref<1x1024x1024xf32, #tpu.memory_space<vmem>>, vector<1x32x1024xf32>,
    }
    %c16_i32_97 = arith.constant 16 : i32
    return
  }
  func.func @transform_0(%arg0: i32, %arg1: i32) -> (i32, i32, i32, i32) {
    %c0_i32 = arith.constant 0 : i32
    %c0_i32_0 = arith.constant 0 : i32
    %c0_i32_1 = arith.constant 0 : i32
    return %arg0, %arg1, %c0_i32, %c0_i32_0 : i32, i32, i32, i32
  }
  func.func @transform_1(%arg0: i32, %arg1: i32) -> (i32, i32, i32) {
    %c0_i32 = arith.constant 0 : i32
    %c0_i32_0 = arith.constant 0 : i32
    %c0_i32_1 = arith.constant 0 : i32
    %c0_i32_2 = arith.constant 0 : i32
    return %c0_i32, %c0_i32_0, %c0_i32_1 : i32, i32, i32
  }
  func.func @transform_2(%arg0: i32, %arg1: i32) -> (i32, i32, i32) {
    %c0_i32 = arith.constant 0 : i32
    %c0_i32_0 = arith.constant 0 : i32
    return %arg0, %arg1, %c0_i32 : i32, i32, i32
  }
}

</mosaic_0001>

<llo_original>
// kernel: forward.1
$region0: #{forward.1}
  #allocation0 [shape = 'u32[]', space=smem, size = 0x4, offset = 0x4, fixed_abs, tag = 'smem constant byte address 0x4 - core index']
  #allocation1 [shape = 'u32[144,128]{1,0:T(1,128)}', space=vmem, size = 0x12000, scoped, tag = 'internal scratch']
  #allocation2 [shape = 'f32[4,64,1024]{2,1,0:T(8,128)}', space=vmem, size = 0x100000, scoped, tag = 'scratch operand']
  %s0 = inlined_call_operand.hbm [shape: f32[2,16,5,1024], index: 0, kind: input, shape index: {}]
  %s1 = inlined_call_operand.vmem [shape: f32[4,64,128], index: 1, kind: input, shape index: {}]
  %s2 = inlined_call_operand.hbm [shape: f32[2,1024,1024], index: 2, kind: output, shape index: {}]
  %s3 = sld [smem:[#allocation0]]
  $region52: #{forward.1} parent=0
    _
  %s5 = ssub.s32 1, %s3
  %s6 = scalar_select 0, %s5, %s3
  $region1: #{forward.1} parent=0
    #allocation3 [shape = 'u8[1048576]{0}', space=vmem, size = 0x100000, scoped, tag = 'input window, operand 0']
    #allocation4 [shape = 's32[2]{0}', space=sflag, size = 0x8, scoped, tag = 'scoped memory for forward.1']
    #allocation5 [shape = 's32[2]{0}', space=sflag, size = 0x8, scoped, tag = 'scoped memory for forward.1']
    #allocation6 [shape = 'u8[8388608]{0}', space=vmem, size = 0x800000, scoped, tag = 'output window, operand 0']
    %7 = vsyncpa [#allocation4], 0
    %s8 = scalar_lea.sflag [#allocation4], 1
    %9 = vsyncpa %s8, 0
    %10 = vsyncpa [#allocation5], 0
    %s11 = scalar_lea.sflag [#allocation5], 1
    %12 = vsyncpa %s11, 0
    loop: start=0, step=1, limit=4
    $region2: #{forward.1} parent=1 // loop_pre_header
      _
    $region3: #{forward.1} parent=1 // loop_header
      %s14 = sphi 0, %s18
      %p15 = scmp.ge.s32.totalorder %s14, 4
      %s21 = sphi 0, %s33
      %s22 = sphi 0, %s29
      %s23 = sphi 0, %s21
      %s24 = sphi 0, %s22
      %s25 = sphi 0, %s23
      %s26 = sphi 0, %s24
      %s38 = sphi 0, %s40
      %s41 = sphi 0, %s38
      %s42 = sphi 0, %s41
      %s58 = sphi 0, %s42
      %s62 = sphi 0, %s62
      %s64 = sphi 0, %s62
      %s65 = sphi 0, %s64
      %s79 = sphi 0, %s65
      %s87 = sphi 0, %s89
      %s90 = sphi 0, %s87
      %s91 = sphi 0, %s90
      %s107 = sphi 0, %s91
    $region4: #{forward.1} parent=1 // loop_header_branch
      %17 = sbr.rel (%p15) target = $region8
    $region5: #{forward.1} parent=1 // loop_body
      %s19 = ssub.s32 %s14, 1
      %s20 = ssub.s32 %s14, 2
      %s27 = sadd.s32 1, %s22
      %p28 = scmp.ge.s32.totalorder %s27, 1
      %s29 = scalar_select %p28, 0, %s27
      %s30 = sadd.s32 1, %s21
      %s31 = scalar_select %p28, %s30, %s21
      %p32 = scmp.ge.s32.totalorder %s31, 2
      %s33 = scalar_select %p32, 0, %s31
      %s34 = ssub.s32 %s21, %s33
      %s35 = ssub.s32 %s22, %s29
      %s36 = sor.u32 %s34, %s35
      %p37 = scmp.eq.s32.totalorder %s36, 0
      %s39 = sadd.s32 %s38, 1
      %s40 = scalar_select %p37, %s38, %s39
      %p43 = pneg %p37
      %p44 = scmp.eq.s32.totalorder %s14, 1
      %p45 = por %p43, %p44
      %p46 = scmp.ne.s32.totalorder %s38, %s41
      %p47 = scmp.eq.s32.totalorder %s14, 0
      %p48 = por %p46, %p47
      %p49 = scmp.ne.s32.totalorder %s38, %s41
      %p50 = scmp.eq.s32.totalorder %s19, 1
      %p51 = por %p49, %p50
      %p52 = scmp.ne.s32.totalorder %s41, %s42
      %p53 = scmp.eq.s32.totalorder %s19, 0
      %p54 = por %p52, %p53
      %p55 = scmp.ne.s32.totalorder %s41, %s42
      %p56 = scmp.eq.s32.totalorder %s20, 1
      %p57 = por %p55, %p56
      %p59 = scmp.ne.s32.totalorder %s42, %s58
      %p60 = scmp.eq.s32.totalorder %s20, 0
      %p61 = por %p59, %p60
      %s63 = sadd.s32 %s62, 1
      %p66 = scmp.eq.s32.totalorder %s14, 1
      %p67 = scmp.ne.s32.totalorder %s62, %s64
      %p68 = scmp.eq.s32.totalorder %s14, 0
      %p69 = por %p67, %p68
      %p70 = scmp.ne.s32.totalorder %s62, %s64
      %p71 = scmp.eq.s32.totalorder %s19, 1
      %p72 = por %p70, %p71
      %p73 = scmp.ne.s32.totalorder %s64, %s65
      %p74 = scmp.eq.s32.totalorder %s19, 0
      %p75 = por %p73, %p74
      %p76 = scmp.ne.s32.totalorder %s64, %s65
      %p77 = scmp.eq.s32.totalorder %s20, 1
      %p78 = por %p76, %p77
      %p80 = scmp.ne.s32.totalorder %s65, %s79
      %p81 = scmp.eq.s32.totalorder %s20, 0
      %p82 = por %p80, %p81
      %s83 = ssub.s32 %s21, %s33
      %s84 = ssub.s32 %s22, %s29
      %s85 = sor.u32 %s83, %s84
      %p86 = scmp.eq.s32.totalorder %s85, 0
      %s88 = sadd.s32 %s87, 1
      %s89 = scalar_select %p86, %s87, %s88
      %p92 = pneg %p86
      %p93 = scmp.eq.s32.totalorder %s14, 1
      %p94 = por %p92, %p93
      %p95 = scmp.ne.s32.totalorder %s87, %s90
      %p96 = scmp.eq.s32.totalorder %s14, 0
      %p97 = por %p95, %p96
      %p98 = scmp.ne.s32.totalorder %s87, %s90
      %p99 = scmp.eq.s32.totalorder %s19, 1
      %p100 = por %p98, %p99
      %p101 = scmp.ne.s32.totalorder %s90, %s91
      %p102 = scmp.eq.s32.totalorder %s19, 0
      %p103 = por %p101, %p102
      %p104 = scmp.ne.s32.totalorder %s90, %s91
      %p105 = scmp.eq.s32.totalorder %s20, 1
      %p106 = por %p104, %p105
      %p108 = scmp.ne.s32.totalorder %s91, %s107
      %p109 = scmp.eq.s32.totalorder %s20, 0
      %p110 = por %p108, %p109
      %p111 = scmp.le.s32.totalorder 1, %s14
      %p112 = scmp.lt.s32.totalorder %s14, 3
      %p113 = pnand %p111, %p112
      %p114 = pneg %p113
      // Predicated region
      $region9: #{forward.1} parent=5 // pred_check
        _
      $region10: #{forward.1} parent=5 // pred_check_branch
        %116 = sbr.rel (%p113) target = $region12
      $region11: #{forward.1} parent=5 // pred_region
        %s117 = ssub.s32 %s14, 1
        // Predicated region
        $region13: #{forward.1} parent=11 // pred_check
          %p118 = pneg %p75
        $region14: #{forward.1} parent=11 // pred_check_branch
          %120 = sbr.rel (%p118) target = $region16
        $region15: #{forward.1} parent=11 // pred_region
          _
        $region16: #{forward.1} parent=11 // pred_fallthru
          _
      $region12: #{forward.1} parent=5 // pred_fallthru
        _
      %p121 = scmp.lt.s32.totalorder %s14, 2
      // Predicated region
      $region17: #{forward.1} parent=5 // pred_check
        %p122 = pneg %p121
      $region18: #{forward.1} parent=5 // pred_check_branch
        %124 = sbr.rel (%p122) target = $region20
      $region19: #{forward.1} parent=5 // pred_region
        // Predicated region
        $region21: #{forward.1} parent=19 // pred_check
          %p125 = pneg %p48
        $region22: #{forward.1} parent=19 // pred_check_branch
          %127 = sbr.rel (%p125) target = $region24
        $region23: #{forward.1} parent=19 // pred_region
          %s128 = sand.u32 %s38, 1
          %s129 = scalar_lea.sflag [#allocation4], %s128
          %s130 = sand.u32 %s38, 1
          %s131 = smul.addr %s130, 1024
          %s132 = scalar_lea.vmem [#allocation3], %s131
          %s133 = smul.u32 16, %s22
          %s135 = ssub.s32 16384, 16384
          %136 = vsyncadd %s129, %s135
          %s137 = smul.addr %s133, 8
          %s138 = smul.addr %s21, 128
          %s139 = sadd.s32 %s137, %s138
          %s140 = smul.addr %s139, 128
          %s141 = scalar_lea.hbm %s0, %s140
          %s142 = sshll.u32 %s132, 4
          %s143 = int_to_ptr.vmem [resolvable:$true] %s142
          %148 = dma.hbm_to_vmem [thread:$0]  %s141, 16384, %s143, %s129, 1024, 1024, 64
        $region24: #{forward.1} parent=19 // pred_fallthru
          _
      $region20: #{forward.1} parent=5 // pred_fallthru
        _
      %p149 = scmp.le.s32.totalorder 1, %s14
      %p150 = scmp.lt.s32.totalorder %s14, 3
      %p151 = pnand %p149, %p150
      %p152 = pneg %p151
      // Predicated region
      $region25: #{forward.1} parent=5 // pred_check
        _
      $region26: #{forward.1} parent=5 // pred_check_branch
        %154 = sbr.rel (%p151) target = $region28
      $region27: #{forward.1} parent=5 // pred_region
        %s155 = ssub.s32 %s14, 1
        %s156 = sand.u32 %s41, 1
        %s157 = scalar_lea.sflag [#allocation4], %s156
        %s158 = sand.u32 %s41, 1
        %s159 = smul.addr %s158, 1024
        %s160 = scalar_lea.vmem [#allocation3], %s159
        // Predicated region
        $region29: #{forward.1} parent=27 // pred_check
          %p161 = pneg %p54
        $region30: #{forward.1} parent=27 // pred_check_branch
          %163 = sbr.rel (%p161) target = $region32
        $region31: #{forward.1} parent=27 // pred_region
          %164 = dma.done %s157, 16384
        $region32: #{forward.1} parent=27 // pred_fallthru
          _
        %s165 = sand.u32 %s41, 1
        %s166 = scalar_lea.sflag [#allocation4], %s165
        %s167 = sand.u32 %s41, 1
        %s168 = smul.addr %s167, 1024
        %s169 = scalar_lea.vmem [#allocation3], %s168
        %p170 = pneg %p54
        %p171 = pneg %p51
        %p172 = pneg %p75
        %p173 = pneg %p72
        %p174 = pneg %p103
        %p175 = pneg %p100
        %s176 = sand.u32 %s90, 1
        %s177 = scalar_lea.sflag [#allocation5], %s176
        %s178 = sand.u32 %s90, 1
        %s179 = smul.addr %s178, 8192
        %s180 = scalar_lea.vmem [#allocation6], %s179
        %s181 = smul.u32 16, %s24
        %s182 = smul.u32 128, %s24
        %v183 = vld [vmem:[%s1] sm:$0xff]
        %v184 = vld [vmem:[%s1 + $0x8] sm:$0xff]
        %v185 = vld [vmem:[%s1 + $0x10] sm:$0xff]
        %v186 = vld [vmem:[%s1 + $0x18] sm:$0xff]
        %v187 = vld [vmem:[%s1 + $0x20] sm:$0xff]
        %v188 = vld [vmem:[%s1 + $0x28] sm:$0xff]
        %v189 = vld [vmem:[%s1 + $0x30] sm:$0xff]
        %v190 = vld [vmem:[%s1 + $0x38] sm:$0xff]
        %191 = vst [vmem:[#allocation2] sm:$0xff] %v183
        %192 = vst [vmem:[#allocation2 + $0x40] sm:$0xff] %v184
        %193 = vst [vmem:[#allocation2 + $0x80] sm:$0xff] %v185
        %194 = vst [vmem:[#allocation2 + $0xc0] sm:$0xff] %v186
        %195 = vst [vmem:[#allocation2 + $0x100] sm:$0xff] %v187
        %196 = vst [vmem:[#allocation2 + $0x140] sm:$0xff] %v188
        %197 = vst [vmem:[#allocation2 + $0x180] sm:$0xff] %v189
        %198 = vst [vmem:[#allocation2 + $0x1c0] sm:$0xff] %v190
        %199 = vst [vmem:[#allocation2 + $0x8] sm:$0xff] %v183
        %200 = vst [vmem:[#allocation2 + $0x48] sm:$0xff] %v184
        %201 = vst [vmem:[#allocation2 + $0x88] sm:$0xff] %v185
        %202 = vst [vmem:[#allocation2 + $0xc8] sm:$0xff] %v186
        %203 = vst [vmem:[#allocation2 + $0x108] sm:$0xff] %v187
        %204 = vst [vmem:[#allocation2 + $0x148] sm:$0xff] %v188
        %205 = vst [vmem:[#allocation2 + $0x188] sm:$0xff] %v189
        %206 = vst [vmem:[#allocation2 + $0x1c8] sm:$0xff] %v190
        %207 = vst [vmem:[#allocation2 + $0x10] sm:$0xff] %v183
        %208 = vst [vmem:[#allocation2 + $0x50] sm:$0xff] %v184
        %209 = vst [vmem:[#allocation2 + $0x90] sm:$0xff] %v185
        %210 = vst [vmem:[#allocation2 + $0xd0] sm:$0xff] %v186
        %211 = vst [vmem:[#allocation2 + $0x110] sm:$0xff] %v187
        %212 = vst [vmem:[#allocation2 + $0x150] sm:$0xff] %v188
        %213 = vst [vmem:[#allocation2 + $0x190] sm:$0xff] %v189
        %214 = vst [vmem:[#allocation2 + $0x1d0] sm:$0xff] %v190
        %215 = vst [vmem:[#allocation2 + $0x18] sm:$0xff] %v183
        %216 = vst [vmem:[#allocation2 + $0x58] sm:$0xff] %v184
        %217 = vst [vmem:[#allocation2 + $0x98] sm:$0xff] %v185
        %218 = vst [vmem:[#allocation2 + $0xd8] sm:$0xff] %v186
        %219 = vst [vmem:[#allocation2 + $0x118] sm:$0xff] %v187
        %220 = vst [vmem:[#allocation2 + $0x158] sm:$0xff] %v188
        %221 = vst [vmem:[#allocation2 + $0x198] sm:$0xff] %v189
        %222 = vst [vmem:[#allocation2 + $0x1d8] sm:$0xff] %v190
        %223 = vst [vmem:[#allocation2 + $0x20] sm:$0xff] %v183
        %224 = vst [vmem:[#allocation2 + $0x60] sm:$0xff] %v184
        %225 = vst [vmem:[#allocation2 + $0xa0] sm:$0xff] %v185
        %226 = vst [vmem:[#allocation2 + $0xe0] sm:$0xff] %v186
        %227 = vst [vmem:[#allocation2 + $0x120] sm:$0xff] %v187
        %228 = vst [vmem:[#allocation2 + $0x160] sm:$0xff] %v188
        %229 = vst [vmem:[#allocation2 + $0x1a0] sm:$0xff] %v189
        %230 = vst [vmem:[#allocation2 + $0x1e0] sm:$0xff] %v190
        %231 = vst [vmem:[#allocation2 + $0x28] sm:$0xff] %v183
        %232 = vst [vmem:[#allocation2 + $0x68] sm:$0xff] %v184
        %233 = vst [vmem:[#allocation2 + $0xa8] sm:$0xff] %v185
        %234 = vst [vmem:[#allocation2 + $0xe8] sm:$0xff] %v186
        %235 = vst [vmem:[#allocation2 + $0x128] sm:$0xff] %v187
        %236 = vst [vmem:[#allocation2 + $0x168] sm:$0xff] %v188
        %237 = vst [vmem:[#allocation2 + $0x1a8] sm:$0xff] %v189
        %238 = vst [vmem:[#allocation2 + $0x1e8] sm:$0xff] %v190
        %239 = vst [vmem:[#allocation2 + $0x30] sm:$0xff] %v183
        %240 = vst [vmem:[#allocation2 + $0x70] sm:$0xff] %v184
        %241 = vst [vmem:[#allocation2 + $0xb0] sm:$0xff] %v185
        %242 = vst [vmem:[#allocation2 + $0xf0] sm:$0xff] %v186
        %243 = vst [vmem:[#allocation2 + $0x130] sm:$0xff] %v187
        %244 = vst [vmem:[#allocation2 + $0x170] sm:$0xff] %v188
        %245 = vst [vmem:[#allocation2 + $0x1b0] sm:$0xff] %v189
        %246 = vst [vmem:[#allocation2 + $0x1f0] sm:$0xff] %v190
        %247 = vst [vmem:[#allocation2 + $0x38] sm:$0xff] %v183
        %248 = vst [vmem:[#allocation2 + $0x78] sm:$0xff] %v184
        %249 = vst [vmem:[#allocation2 + $0xb8] sm:$0xff] %v185
        %250 = vst [vmem:[#allocation2 + $0xf8] sm:$0xff] %v186
        %251 = vst [vmem:[#allocation2 + $0x138] sm:$0xff] %v187
        %252 = vst [vmem:[#allocation2 + $0x178] sm:$0xff] %v188
        %253 = vst [vmem:[#allocation2 + $0x1b8] sm:$0xff] %v189
        %254 = vst [vmem:[#allocation2 + $0x1f8] sm:$0xff] %v190
        %s255 = scalar_lea.vmem %s1, 64
        %v256 = vld [vmem:[%s255] sm:$0xff]
        %v257 = vld [vmem:[%s255 + $0x8] sm:$0xff]
        %v258 = vld [vmem:[%s255 + $0x10] sm:$0xff]
        %v259 = vld [vmem:[%s255 + $0x18] sm:$0xff]
        %v260 = vld [vmem:[%s255 + $0x20] sm:$0xff]
        %v261 = vld [vmem:[%s255 + $0x28] sm:$0xff]
        %v262 = vld [vmem:[%s255 + $0x30] sm:$0xff]
        %v263 = vld [vmem:[%s255 + $0x38] sm:$0xff]
        %s264 = scalar_lea.vmem [#allocation2], 512
        %265 = vst [vmem:[%s264] sm:$0xff] %v256
        %266 = vst [vmem:[%s264 + $0x40] sm:$0xff] %v257
        %267 = vst [vmem:[%s264 + $0x80] sm:$0xff] %v258
        %268 = vst [vmem:[%s264 + $0xc0] sm:$0xff] %v259
        %269 = vst [vmem:[%s264 + $0x100] sm:$0xff] %v260
        %270 = vst [vmem:[%s264 + $0x140] sm:$0xff] %v261
        %271 = vst [vmem:[%s264 + $0x180] sm:$0xff] %v262
        %272 = vst [vmem:[%s264 + $0x1c0] sm:$0xff] %v263
        %273 = vst [vmem:[%s264 + $0x8] sm:$0xff] %v256
        %274 = vst [vmem:[%s264 + $0x48] sm:$0xff] %v257
        %275 = vst [vmem:[%s264 + $0x88] sm:$0xff] %v258
        %276 = vst [vmem:[%s264 + $0xc8] sm:$0xff] %v259
        %277 = vst [vmem:[%s264 + $0x108] sm:$0xff] %v260
        %278 = vst [vmem:[%s264 + $0x148] sm:$0xff] %v261
        %279 = vst [vmem:[%s264 + $0x188] sm:$0xff] %v262
        %280 = vst [vmem:[%s264 + $0x1c8] sm:$0xff] %v263
        %281 = vst [vmem:[%s264 + $0x10] sm:$0xff] %v256
        %282 = vst [vmem:[%s264 + $0x50] sm:$0xff] %v257
        %283 = vst [vmem:[%s264 + $0x90] sm:$0xff] %v258
        %284 = vst [vmem:[%s264 + $0xd0] sm:$0xff] %v259
        %285 = vst [vmem:[%s264 + $0x110] sm:$0xff] %v260
        %286 = vst [vmem:[%s264 + $0x150] sm:$0xff] %v261
        %287 = vst [vmem:[%s264 + $0x190] sm:$0xff] %v262
        %288 = vst [vmem:[%s264 + $0x1d0] sm:$0xff] %v263
        %289 = vst [vmem:[%s264 + $0x18] sm:$0xff] %v256
        %290 = vst [vmem:[%s264 + $0x58] sm:$0xff] %v257
        %291 = vst [vmem:[%s264 + $0x98] sm:$0xff] %v258
        %292 = vst [vmem:[%s264 + $0xd8] sm:$0xff] %v259
        %293 = vst [vmem:[%s264 + $0x118] sm:$0xff] %v260
        %294 = vst [vmem:[%s264 + $0x158] sm:$0xff] %v261
        %295 = vst [vmem:[%s264 + $0x198] sm:$0xff] %v262
        %296 = vst [vmem:[%s264 + $0x1d8] sm:$0xff] %v263
        %297 = vst [vmem:[%s264 + $0x20] sm:$0xff] %v256
        %298 = vst [vmem:[%s264 + $0x60] sm:$0xff] %v257
        %299 = vst [vmem:[%s264 + $0xa0] sm:$0xff] %v258
        %300 = vst [vmem:[%s264 + $0xe0] sm:$0xff] %v259
        %301 = vst [vmem:[%s264 + $0x120] sm:$0xff] %v260
        %302 = vst [vmem:[%s264 + $0x160] sm:$0xff] %v261
        %303 = vst [vmem:[%s264 + $0x1a0] sm:$0xff] %v262
        %304 = vst [vmem:[%s264 + $0x1e0] sm:$0xff] %v263
        %305 = vst [vmem:[%s264 + $0x28] sm:$0xff] %v256
        %306 = vst [vmem:[%s264 + $0x68] sm:$0xff] %v257
        %307 = vst [vmem:[%s264 + $0xa8] sm:$0xff] %v258
        %308 = vst [vmem:[%s264 + $0xe8] sm:$0xff] %v259
        %309 = vst [vmem:[%s264 + $0x128] sm:$0xff] %v260
        %310 = vst [vmem:[%s264 + $0x168] sm:$0xff] %v261
        %311 = vst [vmem:[%s264 + $0x1a8] sm:$0xff] %v262
        %312 = vst [vmem:[%s264 + $0x1e8] sm:$0xff] %v263
        %313 = vst [vmem:[%s264 + $0x30] sm:$0xff] %v256
        %314 = vst [vmem:[%s264 + $0x70] sm:$0xff] %v257
        %315 = vst [vmem:[%s264 + $0xb0] sm:$0xff] %v258
        %316 = vst [vmem:[%s264 + $0xf0] sm:$0xff] %v259
        %317 = vst [vmem:[%s264 + $0x130] sm:$0xff] %v260
        %318 = vst [vmem:[%s264 + $0x170] sm:$0xff] %v261
        %319 = vst [vmem:[%s264 + $0x1b0] sm:$0xff] %v262
        %320 = vst [vmem:[%s264 + $0x1f0] sm:$0xff] %v263
        %321 = vst [vmem:[%s264 + $0x38] sm:$0xff] %v256
        %322 = vst [vmem:[%s264 + $0x78] sm:$0xff] %v257
        %323 = vst [vmem:[%s264 + $0xb8] sm:$0xff] %v258
        %324 = vst [vmem:[%s264 + $0xf8] sm:$0xff] %v259
        %325 = vst [vmem:[%s264 + $0x138] sm:$0xff] %v260
        %326 = vst [vmem:[%s264 + $0x178] sm:$0xff] %v261
        %327 = vst [vmem:[%s264 + $0x1b8] sm:$0xff] %v262
        %328 = vst [vmem:[%s264 + $0x1f8] sm:$0xff] %v263
        %s329 = scalar_lea.vmem %s1, 128
        %v330 = vld [vmem:[%s329] sm:$0xff]
        %v331 = vld [vmem:[%s329 + $0x8] sm:$0xff]
        %v332 = vld [vmem:[%s329 + $0x10] sm:$0xff]
        %v333 = vld [vmem:[%s329 + $0x18] sm:$0xff]
        %v334 = vld [vmem:[%s329 + $0x20] sm:$0xff]
        %v335 = vld [vmem:[%s329 + $0x28] sm:$0xff]
        %v336 = vld [vmem:[%s329 + $0x30] sm:$0xff]
        %v337 = vld [vmem:[%s329 + $0x38] sm:$0xff]
        %s338 = scalar_lea.vmem [#allocation2], 1024
        %339 = vst [vmem:[%s338] sm:$0xff] %v330
        %340 = vst [vmem:[%s338 + $0x40] sm:$0xff] %v331
        %341 = vst [vmem:[%s338 + $0x80] sm:$0xff] %v332
        %342 = vst [vmem:[%s338 + $0xc0] sm:$0xff] %v333
        %343 = vst [vmem:[%s338 + $0x100] sm:$0xff] %v334
        %344 = vst [vmem:[%s338 + $0x140] sm:$0xff] %v335
        %345 = vst [vmem:[%s338 + $0x180] sm:$0xff] %v336
        %346 = vst [vmem:[%s338 + $0x1c0] sm:$0xff] %v337
        %347 = vst [vmem:[%s338 + $0x8] sm:$0xff] %v330
        %348 = vst [vmem:[%s338 + $0x48] sm:$0xff] %v331
        %349 = vst [vmem:[%s338 + $0x88] sm:$0xff] %v332
        %350 = vst [vmem:[%s338 + $0xc8] sm:$0xff] %v333
        %351 = vst [vmem:[%s338 + $0x108] sm:$0xff] %v334
        %352 = vst [vmem:[%s338 + $0x148] sm:$0xff] %v335
        %353 = vst [vmem:[%s338 + $0x188] sm:$0xff] %v336
        %354 = vst [vmem:[%s338 + $0x1c8] sm:$0xff] %v337
        %355 = vst [vmem:[%s338 + $0x10] sm:$0xff] %v330
        %356 = vst [vmem:[%s338 + $0x50] sm:$0xff] %v331
        %357 = vst [vmem:[%s338 + $0x90] sm:$0xff] %v332
        %358 = vst [vmem:[%s338 + $0xd0] sm:$0xff] %v333
        %359 = vst [vmem:[%s338 + $0x110] sm:$0xff] %v334
        %360 = vst [vmem:[%s338 + $0x150] sm:$0xff] %v335
        %361 = vst [vmem:[%s338 + $0x190] sm:$0xff] %v336
        %362 = vst [vmem:[%s338 + $0x1d0] sm:$0xff] %v337
        %363 = vst [vmem:[%s338 + $0x18] sm:$0xff] %v330
        %364 = vst [vmem:[%s338 + $0x58] sm:$0xff] %v331
        %365 = vst [vmem:[%s338 + $0x98] sm:$0xff] %v332
        %366 = vst [vmem:[%s338 + $0xd8] sm:$0xff] %v333
        %367 = vst [vmem:[%s338 + $0x118] sm:$0xff] %v334
        %368 = vst [vmem:[%s338 + $0x158] sm:$0xff] %v335
        %369 = vst [vmem:[%s338 + $0x198] sm:$0xff] %v336
        %370 = vst [vmem:[%s338 + $0x1d8] sm:$0xff] %v337
        %371 = vst [vmem:[%s338 + $0x20] sm:$0xff] %v330
        %372 = vst [vmem:[%s338 + $0x60] sm:$0xff] %v331
        %373 = vst [vmem:[%s338 + $0xa0] sm:$0xff] %v332
        %374 = vst [vmem:[%s338 + $0xe0] sm:$0xff] %v333
        %375 = vst [vmem:[%s338 + $0x120] sm:$0xff] %v334
        %376 = vst [vmem:[%s338 + $0x160] sm:$0xff] %v335
        %377 = vst [vmem:[%s338 + $0x1a0] sm:$0xff] %v336
        %378 = vst [vmem:[%s338 + $0x1e0] sm:$0xff] %v337
        %379 = vst [vmem:[%s338 + $0x28] sm:$0xff] %v330
        %380 = vst [vmem:[%s338 + $0x68] sm:$0xff] %v331
        %381 = vst [vmem:[%s338 + $0xa8] sm:$0xff] %v332
        %382 = vst [vmem:[%s338 + $0xe8] sm:$0xff] %v333
        %383 = vst [vmem:[%s338 + $0x128] sm:$0xff] %v334
        %384 = vst [vmem:[%s338 + $0x168] sm:$0xff] %v335
        %385 = vst [vmem:[%s338 + $0x1a8] sm:$0xff] %v336
        %386 = vst [vmem:[%s338 + $0x1e8] sm:$0xff] %v337
        %387 = vst [vmem:[%s338 + $0x30] sm:$0xff] %v330
        %388 = vst [vmem:[%s338 + $0x70] sm:$0xff] %v331
        %389 = vst [vmem:[%s338 + $0xb0] sm:$0xff] %v332
        %390 = vst [vmem:[%s338 + $0xf0] sm:$0xff] %v333
        %391 = vst [vmem:[%s338 + $0x130] sm:$0xff] %v334
        %392 = vst [vmem:[%s338 + $0x170] sm:$0xff] %v335
        %393 = vst [vmem:[%s338 + $0x1b0] sm:$0xff] %v336
        %394 = vst [vmem:[%s338 + $0x1f0] sm:$0xff] %v337
        %395 = vst [vmem:[%s338 + $0x38] sm:$0xff] %v330
        %396 = vst [vmem:[%s338 + $0x78] sm:$0xff] %v331
        %397 = vst [vmem:[%s338 + $0xb8] sm:$0xff] %v332
        %398 = vst [vmem:[%s338 + $0xf8] sm:$0xff] %v333
        %399 = vst [vmem:[%s338 + $0x138] sm:$0xff] %v334
        %400 = vst [vmem:[%s338 + $0x178] sm:$0xff] %v335
        %401 = vst [vmem:[%s338 + $0x1b8] sm:$0xff] %v336
        %402 = vst [vmem:[%s338 + $0x1f8] sm:$0xff] %v337
        %s403 = scalar_lea.vmem %s1, 192
        %v404 = vld [vmem:[%s403] sm:$0xff]
        %v405 = vld [vmem:[%s403 + $0x8] sm:$0xff]
        %v406 = vld [vmem:[%s403 + $0x10] sm:$0xff]
        %v407 = vld [vmem:[%s403 + $0x18] sm:$0xff]
        %v408 = vld [vmem:[%s403 + $0x20] sm:$0xff]
        %v409 = vld [vmem:[%s403 + $0x28] sm:$0xff]
        %v410 = vld [vmem:[%s403 + $0x30] sm:$0xff]
        %v411 = vld [vmem:[%s403 + $0x38] sm:$0xff]
        %s412 = scalar_lea.vmem [#allocation2], 1536
        %413 = vst [vmem:[%s412] sm:$0xff] %v404
        %414 = vst [vmem:[%s412 + $0x40] sm:$0xff] %v405
        %415 = vst [vmem:[%s412 + $0x80] sm:$0xff] %v406
        %416 = vst [vmem:[%s412 + $0xc0] sm:$0xff] %v407
        %417 = vst [vmem:[%s412 + $0x100] sm:$0xff] %v408
        %418 = vst [vmem:[%s412 + $0x140] sm:$0xff] %v409
        %419 = vst [vmem:[%s412 + $0x180] sm:$0xff] %v410
        %420 = vst [vmem:[%s412 + $0x1c0] sm:$0xff] %v411
        %421 = vst [vmem:[%s412 + $0x8] sm:$0xff] %v404
        %422 = vst [vmem:[%s412 + $0x48] sm:$0xff] %v405
        %423 = vst [vmem:[%s412 + $0x88] sm:$0xff] %v406
        %424 = vst [vmem:[%s412 + $0xc8] sm:$0xff] %v407
        %425 = vst [vmem:[%s412 + $0x108] sm:$0xff] %v408
        %426 = vst [vmem:[%s412 + $0x148] sm:$0xff] %v409
        %427 = vst [vmem:[%s412 + $0x188] sm:$0xff] %v410
        %428 = vst [vmem:[%s412 + $0x1c8] sm:$0xff] %v411
        %429 = vst [vmem:[%s412 + $0x10] sm:$0xff] %v404
        %430 = vst [vmem:[%s412 + $0x50] sm:$0xff] %v405
        %431 = vst [vmem:[%s412 + $0x90] sm:$0xff] %v406
        %432 = vst [vmem:[%s412 + $0xd0] sm:$0xff] %v407
        %433 = vst [vmem:[%s412 + $0x110] sm:$0xff] %v408
        %434 = vst [vmem:[%s412 + $0x150] sm:$0xff] %v409
        %435 = vst [vmem:[%s412 + $0x190] sm:$0xff] %v410
        %436 = vst [vmem:[%s412 + $0x1d0] sm:$0xff] %v411
        %437 = vst [vmem:[%s412 + $0x18] sm:$0xff] %v404
        %438 = vst [vmem:[%s412 + $0x58] sm:$0xff] %v405
        %439 = vst [vmem:[%s412 + $0x98] sm:$0xff] %v406
        %440 = vst [vmem:[%s412 + $0xd8] sm:$0xff] %v407
        %441 = vst [vmem:[%s412 + $0x118] sm:$0xff] %v408
        %442 = vst [vmem:[%s412 + $0x158] sm:$0xff] %v409
        %443 = vst [vmem:[%s412 + $0x198] sm:$0xff] %v410
        %444 = vst [vmem:[%s412 + $0x1d8] sm:$0xff] %v411
        %445 = vst [vmem:[%s412 + $0x20] sm:$0xff] %v404
        %446 = vst [vmem:[%s412 + $0x60] sm:$0xff] %v405
        %447 = vst [vmem:[%s412 + $0xa0] sm:$0xff] %v406
        %448 = vst [vmem:[%s412 + $0xe0] sm:$0xff] %v407
        %449 = vst [vmem:[%s412 + $0x120] sm:$0xff] %v408
        %450 = vst [vmem:[%s412 + $0x160] sm:$0xff] %v409
        %451 = vst [vmem:[%s412 + $0x1a0] sm:$0xff] %v410
        %452 = vst [vmem:[%s412 + $0x1e0] sm:$0xff] %v411
        %453 = vst [vmem:[%s412 + $0x28] sm:$0xff] %v404
        %454 = vst [vmem:[%s412 + $0x68] sm:$0xff] %v405
        %455 = vst [vmem:[%s412 + $0xa8] sm:$0xff] %v406
        %456 = vst [vmem:[%s412 + $0xe8] sm:$0xff] %v407
        %457 = vst [vmem:[%s412 + $0x128] sm:$0xff] %v408
        %458 = vst [vmem:[%s412 + $0x168] sm:$0xff] %v409
        %459 = vst [vmem:[%s412 + $0x1a8] sm:$0xff] %v410
        %460 = vst [vmem:[%s412 + $0x1e8] sm:$0xff] %v411
        %461 = vst [vmem:[%s412 + $0x30] sm:$0xff] %v404
        %462 = vst [vmem:[%s412 + $0x70] sm:$0xff] %v405
        %463 = vst [vmem:[%s412 + $0xb0] sm:$0xff] %v406
        %464 = vst [vmem:[%s412 + $0xf0] sm:$0xff] %v407
        %465 = vst [vmem:[%s412 + $0x130] sm:$0xff] %v408
        %466 = vst [vmem:[%s412 + $0x170] sm:$0xff] %v409
        %467 = vst [vmem:[%s412 + $0x1b0] sm:$0xff] %v410
        %468 = vst [vmem:[%s412 + $0x1f0] sm:$0xff] %v411
        %469 = vst [vmem:[%s412 + $0x38] sm:$0xff] %v404
        %470 = vst [vmem:[%s412 + $0x78] sm:$0xff] %v405
        %471 = vst [vmem:[%s412 + $0xb8] sm:$0xff] %v406
        %472 = vst [vmem:[%s412 + $0xf8] sm:$0xff] %v407
        %473 = vst [vmem:[%s412 + $0x138] sm:$0xff] %v408
        %474 = vst [vmem:[%s412 + $0x178] sm:$0xff] %v409
        %475 = vst [vmem:[%s412 + $0x1b8] sm:$0xff] %v410
        %476 = vst [vmem:[%s412 + $0x1f8] sm:$0xff] %v411
        loop: start=0, step=1, limit=16
        $region33: #{forward.1} parent=27 // loop_pre_header
          _
        $region34: #{forward.1} parent=27 // loop_header
          %s478 = sphi 0, %s482
          %p479 = scmp.ge.s32.totalorder %s478, 16
        $region35: #{forward.1} parent=27 // loop_header_branch
          %481 = sbr.rel (%p479) target = $region39
        $region36: #{forward.1} parent=27 // loop_body
          %s483 = smul.u32 %s478, 8
          %s484 = smul.addr %s483, 8
          %s485 = scalar_lea.vmem %s160, %s484 [#allocation3]
          %v486 = vld [vmem:[%s485] ss:$8 sm:$0xf]
          %v487 = vld [vmem:[%s485] ss:$8 sm:$0xf0]
          %v488 = vor.u32 %v486, %v487
          %v490 = vlaneseq
          %v491 = vshrl.u32 %v490, 7
          %v492 = vsub.s32 0, %v491
          %v493 = vrot.slane %v488, %v492
          %v494 = vlaneseq
          %v495 = vshrl.u32 %v494, 7
          %v496 = vsub.s32 1, %v495
          %v497 = vrot.slane %v488, %v496
          %v498 = vlaneseq
          %v499 = vshrl.u32 %v498, 7
          %v500 = vsub.s32 2, %v499
          %v501 = vrot.slane %v488, %v500
          %v502 = vlaneseq
          %v503 = vshrl.u32 %v502, 7
          %v504 = vsub.s32 3, %v503
          %v505 = vrot.slane %v488, %v504
          %v506 = vlaneseq
          %v507 = vshrl.u32 %v506, 7
          %v508 = vsub.s32 4, %v507
          %v509 = vrot.slane %v488, %v508
          %v510 = vlaneseq
          %v511 = vshrl.u32 %v510, 7
          %v512 = vsub.s32 5, %v511
          %v513 = vrot.slane %v488, %v512
          %v514 = vlaneseq
          %v515 = vshrl.u32 %v514, 7
          %v516 = vsub.s32 6, %v515
          %v517 = vrot.slane %v488, %v516
          %v518 = vlaneseq
          %v519 = vshrl.u32 %v518, 7
          %v520 = vsub.s32 7, %v519
          %v521 = vrot.slane %v488, %v520
          %s530 = scalar_lea.vmem %s485, 1 [#allocation3]
          %v531 = vld [vmem:[%s530] ss:$8 sm:$0xf]
          %v532 = vld [vmem:[%s530] ss:$8 sm:$0xf0]
          %v533 = vor.u32 %v531, %v532
          %v535 = vlaneseq
          %v536 = vshrl.u32 %v535, 7
          %v537 = vsub.s32 0, %v536
          %v538 = vrot.slane %v533, %v537
          %v539 = vlaneseq
          %v540 = vshrl.u32 %v539, 7
          %v541 = vsub.s32 1, %v540
          %v542 = vrot.slane %v533, %v541
          %v543 = vlaneseq
          %v544 = vshrl.u32 %v543, 7
          %v545 = vsub.s32 2, %v544
          %v546 = vrot.slane %v533, %v545
          %v547 = vlaneseq
          %v548 = vshrl.u32 %v547, 7
          %v549 = vsub.s32 3, %v548
          %v550 = vrot.slane %v533, %v549
          %v551 = vlaneseq
          %v552 = vshrl.u32 %v551, 7
          %v553 = vsub.s32 4, %v552
          %v554 = vrot.slane %v533, %v553
          %v555 = vlaneseq
          %v556 = vshrl.u32 %v555, 7
          %v557 = vsub.s32 5, %v556
          %v558 = vrot.slane %v533, %v557
          %v559 = vlaneseq
          %v560 = vshrl.u32 %v559, 7
          %v561 = vsub.s32 6, %v560
          %v562 = vrot.slane %v533, %v561
          %v563 = vlaneseq
          %v564 = vshrl.u32 %v563, 7
          %v565 = vsub.s32 7, %v564
          %v566 = vrot.slane %v533, %v565
          %s575 = scalar_lea.vmem %s485, 2 [#allocation3]
          %v576 = vld [vmem:[%s575] ss:$8 sm:$0xf]
          %v577 = vld [vmem:[%s575] ss:$8 sm:$0xf0]
          %v578 = vor.u32 %v576, %v577
          %v580 = vlaneseq
          %v581 = vshrl.u32 %v580, 7
          %v582 = vsub.s32 0, %v581
          %v583 = vrot.slane %v578, %v582
          %v584 = vlaneseq
          %v585 = vshrl.u32 %v584, 7
          %v586 = vsub.s32 1, %v585
          %v587 = vrot.slane %v578, %v586
          %v588 = vlaneseq
          %v589 = vshrl.u32 %v588, 7
          %v590 = vsub.s32 2, %v589
          %v591 = vrot.slane %v578, %v590
          %v592 = vlaneseq
          %v593 = vshrl.u32 %v592, 7
          %v594 = vsub.s32 3, %v593
          %v595 = vrot.slane %v578, %v594
          %v596 = vlaneseq
          %v597 = vshrl.u32 %v596, 7
          %v598 = vsub.s32 4, %v597
          %v599 = vrot.slane %v578, %v598
          %v600 = vlaneseq
          %v601 = vshrl.u32 %v600, 7
          %v602 = vsub.s32 5, %v601
          %v603 = vrot.slane %v578, %v602
          %v604 = vlaneseq
          %v605 = vshrl.u32 %v604, 7
          %v606 = vsub.s32 6, %v605
          %v607 = vrot.slane %v578, %v606
          %v608 = vlaneseq
          %v609 = vshrl.u32 %v608, 7
          %v610 = vsub.s32 7, %v609
          %v611 = vrot.slane %v578, %v610
          %s620 = scalar_lea.vmem %s485, 3 [#allocation3]
          %v621 = vld [vmem:[%s620] ss:$8 sm:$0xf]
          %v622 = vld [vmem:[%s620] ss:$8 sm:$0xf0]
          %v623 = vor.u32 %v621, %v622
          %v625 = vlaneseq
          %v626 = vshrl.u32 %v625, 7
          %v627 = vsub.s32 0, %v626
          %v628 = vrot.slane %v623, %v627
          %v629 = vlaneseq
          %v630 = vshrl.u32 %v629, 7
          %v631 = vsub.s32 1, %v630
          %v632 = vrot.slane %v623, %v631
          %v633 = vlaneseq
          %v634 = vshrl.u32 %v633, 7
          %v635 = vsub.s32 2, %v634
          %v636 = vrot.slane %v623, %v635
          %v637 = vlaneseq
          %v638 = vshrl.u32 %v637, 7
          %v639 = vsub.s32 3, %v638
          %v640 = vrot.slane %v623, %v639
          %v641 = vlaneseq
          %v642 = vshrl.u32 %v641, 7
          %v643 = vsub.s32 4, %v642
          %v644 = vrot.slane %v623, %v643
          %v645 = vlaneseq
          %v646 = vshrl.u32 %v645, 7
          %v647 = vsub.s32 5, %v646
          %v648 = vrot.slane %v623, %v647
          %v649 = vlaneseq
          %v650 = vshrl.u32 %v649, 7
          %v651 = vsub.s32 6, %v650
          %v652 = vrot.slane %v623, %v651
          %v653 = vlaneseq
          %v654 = vshrl.u32 %v653, 7
          %v655 = vsub.s32 7, %v654
          %v656 = vrot.slane %v623, %v655
          %s665 = scalar_lea.vmem %s485, 4 [#allocation3]
          %v666 = vld [vmem:[%s665] ss:$8 sm:$0xf]
          %v667 = vld [vmem:[%s665] ss:$8 sm:$0xf0]
          %v668 = vor.u32 %v666, %v667
          %v670 = vlaneseq
          %v671 = vshrl.u32 %v670, 7
          %v672 = vsub.s32 0, %v671
          %v673 = vrot.slane %v668, %v672
          %v674 = vlaneseq
          %v675 = vshrl.u32 %v674, 7
          %v676 = vsub.s32 1, %v675
          %v677 = vrot.slane %v668, %v676
          %v678 = vlaneseq
          %v679 = vshrl.u32 %v678, 7
          %v680 = vsub.s32 2, %v679
          %v681 = vrot.slane %v668, %v680
          %v682 = vlaneseq
          %v683 = vshrl.u32 %v682, 7
          %v684 = vsub.s32 3, %v683
          %v685 = vrot.slane %v668, %v684
          %v686 = vlaneseq
          %v687 = vshrl.u32 %v686, 7
          %v688 = vsub.s32 4, %v687
          %v689 = vrot.slane %v668, %v688
          %v690 = vlaneseq
          %v691 = vshrl.u32 %v690, 7
          %v692 = vsub.s32 5, %v691
          %v693 = vrot.slane %v668, %v692
          %v694 = vlaneseq
          %v695 = vshrl.u32 %v694, 7
          %v696 = vsub.s32 6, %v695
          %v697 = vrot.slane %v668, %v696
          %v698 = vlaneseq
          %v699 = vshrl.u32 %v698, 7
          %v700 = vsub.s32 7, %v699
          %v701 = vrot.slane %v668, %v700
          %v710 = vld [vmem:[#allocation2] sm:$0xff]
          %v711 = vld [vmem:[#allocation2 + $0x8] sm:$0xff]
          %v712 = vld [vmem:[#allocation2 + $0x10] sm:$0xff]
          %v713 = vld [vmem:[#allocation2 + $0x18] sm:$0xff]
          %v714 = vld [vmem:[#allocation2 + $0x20] sm:$0xff]
          %v715 = vld [vmem:[#allocation2 + $0x28] sm:$0xff]
          %v716 = vld [vmem:[#allocation2 + $0x30] sm:$0xff]
          %v717 = vld [vmem:[#allocation2 + $0x38] sm:$0xff]
          %v718 = vld [vmem:[#allocation2 + $0x40] sm:$0xff]
          %v719 = vld [vmem:[#allocation2 + $0x48] sm:$0xff]
          %v720 = vld [vmem:[#allocation2 + $0x50] sm:$0xff]
          %v721 = vld [vmem:[#allocation2 + $0x58] sm:$0xff]
          %v722 = vld [vmem:[#allocation2 + $0x60] sm:$0xff]
          %v723 = vld [vmem:[#allocation2 + $0x68] sm:$0xff]
          %v724 = vld [vmem:[#allocation2 + $0x70] sm:$0xff]
          %v725 = vld [vmem:[#allocation2 + $0x78] sm:$0xff]
          %v726 = vld [vmem:[#allocation2 + $0x80] sm:$0xff]
          %v727 = vld [vmem:[#allocation2 + $0x88] sm:$0xff]
          %v728 = vld [vmem:[#allocation2 + $0x90] sm:$0xff]
          %v729 = vld [vmem:[#allocation2 + $0x98] sm:$0xff]
          %v730 = vld [vmem:[#allocation2 + $0xa0] sm:$0xff]
          %v731 = vld [vmem:[#allocation2 + $0xa8] sm:$0xff]
          %v732 = vld [vmem:[#allocation2 + $0xb0] sm:$0xff]
          %v733 = vld [vmem:[#allocation2 + $0xb8] sm:$0xff]
          %v734 = vld [vmem:[#allocation2 + $0xc0] sm:$0xff]
          %v735 = vld [vmem:[#allocation2 + $0xc8] sm:$0xff]
          %v736 = vld [vmem:[#allocation2 + $0xd0] sm:$0xff]
          %v737 = vld [vmem:[#allocation2 + $0xd8] sm:$0xff]
          %v738 = vld [vmem:[#allocation2 + $0xe0] sm:$0xff]
          %v739 = vld [vmem:[#allocation2 + $0xe8] sm:$0xff]
          %v740 = vld [vmem:[#allocation2 + $0xf0] sm:$0xff]
          %v741 = vld [vmem:[#allocation2 + $0xf8] sm:$0xff]
          %v742 = vmul.f32 %v493, %v710
          %v743 = vmul.f32 %v497, %v711
          %v744 = vmul.f32 %v501, %v712
          %v745 = vmul.f32 %v505, %v713
          %v746 = vmul.f32 %v509, %v714
          %v747 = vmul.f32 %v513, %v715
          %v748 = vmul.f32 %v517, %v716
          %v749 = vmul.f32 %v521, %v717
          %v750 = vmul.f32 %v493, %v718
          %v751 = vmul.f32 %v497, %v719
          %v752 = vmul.f32 %v501, %v720
          %v753 = vmul.f32 %v505, %v721
          %v754 = vmul.f32 %v509, %v722
          %v755 = vmul.f32 %v513, %v723
          %v756 = vmul.f32 %v517, %v724
          %v757 = vmul.f32 %v521, %v725
          %v758 = vmul.f32 %v493, %v726
          %v759 = vmul.f32 %v497, %v727
          %v760 = vmul.f32 %v501, %v728
          %v761 = vmul.f32 %v505, %v729
          %v762 = vmul.f32 %v509, %v730
          %v763 = vmul.f32 %v513, %v731
          %v764 = vmul.f32 %v517, %v732
          %v765 = vmul.f32 %v521, %v733
          %v766 = vmul.f32 %v493, %v734
          %v767 = vmul.f32 %v497, %v735
          %v768 = vmul.f32 %v501, %v736
          %v769 = vmul.f32 %v505, %v737
          %v770 = vmul.f32 %v509, %v738
          %v771 = vmul.f32 %v513, %v739
          %v772 = vmul.f32 %v517, %v740
          %v773 = vmul.f32 %v521, %v741
          %v774 = vadd.f32 %v742, %v673
          %v775 = vadd.f32 %v743, %v677
          %v776 = vadd.f32 %v744, %v681
          %v777 = vadd.f32 %v745, %v685
          %v778 = vadd.f32 %v746, %v689
          %v779 = vadd.f32 %v747, %v693
          %v780 = vadd.f32 %v748, %v697
          %v781 = vadd.f32 %v749, %v701
          %v782 = vadd.f32 %v750, %v673
          %v783 = vadd.f32 %v751, %v677
          %v784 = vadd.f32 %v752, %v681
          %v785 = vadd.f32 %v753, %v685
          %v786 = vadd.f32 %v754, %v689
          %v787 = vadd.f32 %v755, %v693
          %v788 = vadd.f32 %v756, %v697
          %v789 = vadd.f32 %v757, %v701
          %v790 = vadd.f32 %v758, %v673
          %v791 = vadd.f32 %v759, %v677
          %v792 = vadd.f32 %v760, %v681
          %v793 = vadd.f32 %v761, %v685
          %v794 = vadd.f32 %v762, %v689
          %v795 = vadd.f32 %v763, %v693
          %v796 = vadd.f32 %v764, %v697
          %v797 = vadd.f32 %v765, %v701
          %v798 = vadd.f32 %v766, %v673
          %v799 = vadd.f32 %v767, %v677
          %v800 = vadd.f32 %v768, %v681
          %v801 = vadd.f32 %v769, %v685
          %v802 = vadd.f32 %v770, %v689
          %v803 = vadd.f32 %v771, %v693
          %v804 = vadd.f32 %v772, %v697
          %v805 = vadd.f32 %v773, %v701
          %v806 = vld [vmem:[%s264] sm:$0xff]
          %v807 = vld [vmem:[%s264 + $0x8] sm:$0xff]
          %v808 = vld [vmem:[%s264 + $0x10] sm:$0xff]
          %v809 = vld [vmem:[%s264 + $0x18] sm:$0xff]
          %v810 = vld [vmem:[%s264 + $0x20] sm:$0xff]
          %v811 = vld [vmem:[%s264 + $0x28] sm:$0xff]
          %v812 = vld [vmem:[%s264 + $0x30] sm:$0xff]
          %v813 = vld [vmem:[%s264 + $0x38] sm:$0xff]
          %v814 = vld [vmem:[%s264 + $0x40] sm:$0xff]
          %v815 = vld [vmem:[%s264 + $0x48] sm:$0xff]
          %v816 = vld [vmem:[%s264 + $0x50] sm:$0xff]
          %v817 = vld [vmem:[%s264 + $0x58] sm:$0xff]
          %v818 = vld [vmem:[%s264 + $0x60] sm:$0xff]
          %v819 = vld [vmem:[%s264 + $0x68] sm:$0xff]
          %v820 = vld [vmem:[%s264 + $0x70] sm:$0xff]
          %v821 = vld [vmem:[%s264 + $0x78] sm:$0xff]
          %v822 = vld [vmem:[%s264 + $0x80] sm:$0xff]
          %v823 = vld [vmem:[%s264 + $0x88] sm:$0xff]
          %v824 = vld [vmem:[%s264 + $0x90] sm:$0xff]
          %v825 = vld [vmem:[%s264 + $0x98] sm:$0xff]
          %v826 = vld [vmem:[%s264 + $0xa0] sm:$0xff]
          %v827 = vld [vmem:[%s264 + $0xa8] sm:$0xff]
          %v828 = vld [vmem:[%s264 + $0xb0] sm:$0xff]
          %v829 = vld [vmem:[%s264 + $0xb8] sm:$0xff]
          %v830 = vld [vmem:[%s264 + $0xc0] sm:$0xff]
          %v831 = vld [vmem:[%s264 + $0xc8] sm:$0xff]
          %v832 = vld [vmem:[%s264 + $0xd0] sm:$0xff]
          %v833 = vld [vmem:[%s264 + $0xd8] sm:$0xff]
          %v834 = vld [vmem:[%s264 + $0xe0] sm:$0xff]
          %v835 = vld [vmem:[%s264 + $0xe8] sm:$0xff]
          %v836 = vld [vmem:[%s264 + $0xf0] sm:$0xff]
          %v837 = vld [vmem:[%s264 + $0xf8] sm:$0xff]
          %v838 = vmul.f32 %v538, %v806
          %v839 = vmul.f32 %v542, %v807
          %v840 = vmul.f32 %v546, %v808
          %v841 = vmul.f32 %v550, %v809
          %v842 = vmul.f32 %v554, %v810
          %v843 = vmul.f32 %v558, %v811
          %v844 = vmul.f32 %v562, %v812
          %v845 = vmul.f32 %v566, %v813
          %v846 = vmul.f32 %v538, %v814
          %v847 = vmul.f32 %v542, %v815
          %v848 = vmul.f32 %v546, %v816
          %v849 = vmul.f32 %v550, %v817
          %v850 = vmul.f32 %v554, %v818
          %v851 = vmul.f32 %v558, %v819
          %v852 = vmul.f32 %v562, %v820
          %v853 = vmul.f32 %v566, %v821
          %v854 = vmul.f32 %v538, %v822
          %v855 = vmul.f32 %v542, %v823
          %v856 = vmul.f32 %v546, %v824
          %v857 = vmul.f32 %v550, %v825
          %v858 = vmul.f32 %v554, %v826
          %v859 = vmul.f32 %v558, %v827
          %v860 = vmul.f32 %v562, %v828
          %v861 = vmul.f32 %v566, %v829
          %v862 = vmul.f32 %v538, %v830
          %v863 = vmul.f32 %v542, %v831
          %v864 = vmul.f32 %v546, %v832
          %v865 = vmul.f32 %v550, %v833
          %v866 = vmul.f32 %v554, %v834
          %v867 = vmul.f32 %v558, %v835
          %v868 = vmul.f32 %v562, %v836
          %v869 = vmul.f32 %v566, %v837
          %v870 = vadd.f32 %v774, %v838
          %v871 = vadd.f32 %v775, %v839
          %v872 = vadd.f32 %v776, %v840
          %v873 = vadd.f32 %v777, %v841
          %v874 = vadd.f32 %v778, %v842
          %v875 = vadd.f32 %v779, %v843
          %v876 = vadd.f32 %v780, %v844
          %v877 = vadd.f32 %v781, %v845
          %v878 = vadd.f32 %v782, %v846
          %v879 = vadd.f32 %v783, %v847
          %v880 = vadd.f32 %v784, %v848
          %v881 = vadd.f32 %v785, %v849
          %v882 = vadd.f32 %v786, %v850
          %v883 = vadd.f32 %v787, %v851
          %v884 = vadd.f32 %v788, %v852
          %v885 = vadd.f32 %v789, %v853
          %v886 = vadd.f32 %v790, %v854
          %v887 = vadd.f32 %v791, %v855
          %v888 = vadd.f32 %v792, %v856
          %v889 = vadd.f32 %v793, %v857
          %v890 = vadd.f32 %v794, %v858
          %v891 = vadd.f32 %v795, %v859
          %v892 = vadd.f32 %v796, %v860
          %v893 = vadd.f32 %v797, %v861
          %v894 = vadd.f32 %v798, %v862
          %v895 = vadd.f32 %v799, %v863
          %v896 = vadd.f32 %v800, %v864
          %v897 = vadd.f32 %v801, %v865
          %v898 = vadd.f32 %v802, %v866
          %v899 = vadd.f32 %v803, %v867
          %v900 = vadd.f32 %v804, %v868
          %v901 = vadd.f32 %v805, %v869
          %v902 = vld [vmem:[%s338] sm:$0xff]
          %v903 = vld [vmem:[%s338 + $0x8] sm:$0xff]
          %v904 = vld [vmem:[%s338 + $0x10] sm:$0xff]
          %v905 = vld [vmem:[%s338 + $0x18] sm:$0xff]
          %v906 = vld [vmem:[%s338 + $0x20] sm:$0xff]
          %v907 = vld [vmem:[%s338 + $0x28] sm:$0xff]
          %v908 = vld [vmem:[%s338 + $0x30] sm:$0xff]
          %v909 = vld [vmem:[%s338 + $0x38] sm:$0xff]
          %v910 = vld [vmem:[%s338 + $0x40] sm:$0xff]
          %v911 = vld [vmem:[%s338 + $0x48] sm:$0xff]
          %v912 = vld [vmem:[%s338 + $0x50] sm:$0xff]
          %v913 = vld [vmem:[%s338 + $0x58] sm:$0xff]
          %v914 = vld [vmem:[%s338 + $0x60] sm:$0xff]
          %v915 = vld [vmem:[%s338 + $0x68] sm:$0xff]
          %v916 = vld [vmem:[%s338 + $0x70] sm:$0xff]
          %v917 = vld [vmem:[%s338 + $0x78] sm:$0xff]
          %v918 = vld [vmem:[%s338 + $0x80] sm:$0xff]
          %v919 = vld [vmem:[%s338 + $0x88] sm:$0xff]
          %v920 = vld [vmem:[%s338 + $0x90] sm:$0xff]
          %v921 = vld [vmem:[%s338 + $0x98] sm:$0xff]
          %v922 = vld [vmem:[%s338 + $0xa0] sm:$0xff]
          %v923 = vld [vmem:[%s338 + $0xa8] sm:$0xff]
          %v924 = vld [vmem:[%s338 + $0xb0] sm:$0xff]
          %v925 = vld [vmem:[%s338 + $0xb8] sm:$0xff]
          %v926 = vld [vmem:[%s338 + $0xc0] sm:$0xff]
          %v927 = vld [vmem:[%s338 + $0xc8] sm:$0xff]
          %v928 = vld [vmem:[%s338 + $0xd0] sm:$0xff]
          %v929 = vld [vmem:[%s338 + $0xd8] sm:$0xff]
          %v930 = vld [vmem:[%s338 + $0xe0] sm:$0xff]
          %v931 = vld [vmem:[%s338 + $0xe8] sm:$0xff]
          %v932 = vld [vmem:[%s338 + $0xf0] sm:$0xff]
          %v933 = vld [vmem:[%s338 + $0xf8] sm:$0xff]
          %v934 = vmul.f32 %v583, %v902
          %v935 = vmul.f32 %v587, %v903
          %v936 = vmul.f32 %v591, %v904
          %v937 = vmul.f32 %v595, %v905
          %v938 = vmul.f32 %v599, %v906
          %v939 = vmul.f32 %v603, %v907
          %v940 = vmul.f32 %v607, %v908
          %v941 = vmul.f32 %v611, %v909
          %v942 = vmul.f32 %v583, %v910
          %v943 = vmul.f32 %v587, %v911
          %v944 = vmul.f32 %v591, %v912
          %v945 = vmul.f32 %v595, %v913
          %v946 = vmul.f32 %v599, %v914
          %v947 = vmul.f32 %v603, %v915
          %v948 = vmul.f32 %v607, %v916
          %v949 = vmul.f32 %v611, %v917
          %v950 = vmul.f32 %v583, %v918
          %v951 = vmul.f32 %v587, %v919
          %v952 = vmul.f32 %v591, %v920
          %v953 = vmul.f32 %v595, %v921
          %v954 = vmul.f32 %v599, %v922
          %v955 = vmul.f32 %v603, %v923
          %v956 = vmul.f32 %v607, %v924
          %v957 = vmul.f32 %v611, %v925
          %v958 = vmul.f32 %v583, %v926
          %v959 = vmul.f32 %v587, %v927
          %v960 = vmul.f32 %v591, %v928
          %v961 = vmul.f32 %v595, %v929
          %v962 = vmul.f32 %v599, %v930
          %v963 = vmul.f32 %v603, %v931
          %v964 = vmul.f32 %v607, %v932
          %v965 = vmul.f32 %v611, %v933
          %v966 = vadd.f32 %v870, %v934
          %v967 = vadd.f32 %v871, %v935
          %v968 = vadd.f32 %v872, %v936
          %v969 = vadd.f32 %v873, %v937
          %v970 = vadd.f32 %v874, %v938
          %v971 = vadd.f32 %v875, %v939
          %v972 = vadd.f32 %v876, %v940
          %v973 = vadd.f32 %v877, %v941
          %v974 = vadd.f32 %v878, %v942
          %v975 = vadd.f32 %v879, %v943
          %v976 = vadd.f32 %v880, %v944
          %v977 = vadd.f32 %v881, %v945
          %v978 = vadd.f32 %v882, %v946
          %v979 = vadd.f32 %v883, %v947
          %v980 = vadd.f32 %v884, %v948
          %v981 = vadd.f32 %v885, %v949
          %v982 = vadd.f32 %v886, %v950
          %v983 = vadd.f32 %v887, %v951
          %v984 = vadd.f32 %v888, %v952
          %v985 = vadd.f32 %v889, %v953
          %v986 = vadd.f32 %v890, %v954
          %v987 = vadd.f32 %v891, %v955
          %v988 = vadd.f32 %v892, %v956
          %v989 = vadd.f32 %v893, %v957
          %v990 = vadd.f32 %v894, %v958
          %v991 = vadd.f32 %v895, %v959
          %v992 = vadd.f32 %v896, %v960
          %v993 = vadd.f32 %v897, %v961
          %v994 = vadd.f32 %v898, %v962
          %v995 = vadd.f32 %v899, %v963
          %v996 = vadd.f32 %v900, %v964
          %v997 = vadd.f32 %v901, %v965
          %v998 = vld [vmem:[%s412] sm:$0xff]
          %v999 = vld [vmem:[%s412 + $0x8] sm:$0xff]
          %v1000 = vld [vmem:[%s412 + $0x10] sm:$0xff]
          %v1001 = vld [vmem:[%s412 + $0x18] sm:$0xff]
          %v1002 = vld [vmem:[%s412 + $0x20] sm:$0xff]
          %v1003 = vld [vmem:[%s412 + $0x28] sm:$0xff]
          %v1004 = vld [vmem:[%s412 + $0x30] sm:$0xff]
          %v1005 = vld [vmem:[%s412 + $0x38] sm:$0xff]
          %v1006 = vld [vmem:[%s412 + $0x40] sm:$0xff]
          %v1007 = vld [vmem:[%s412 + $0x48] sm:$0xff]
          %v1008 = vld [vmem:[%s412 + $0x50] sm:$0xff]
          %v1009 = vld [vmem:[%s412 + $0x58] sm:$0xff]
          %v1010 = vld [vmem:[%s412 + $0x60] sm:$0xff]
          %v1011 = vld [vmem:[%s412 + $0x68] sm:$0xff]
          %v1012 = vld [vmem:[%s412 + $0x70] sm:$0xff]
          %v1013 = vld [vmem:[%s412 + $0x78] sm:$0xff]
          %v1014 = vld [vmem:[%s412 + $0x80] sm:$0xff]
          %v1015 = vld [vmem:[%s412 + $0x88] sm:$0xff]
          %v1016 = vld [vmem:[%s412 + $0x90] sm:$0xff]
          %v1017 = vld [vmem:[%s412 + $0x98] sm:$0xff]
          %v1018 = vld [vmem:[%s412 + $0xa0] sm:$0xff]
          %v1019 = vld [vmem:[%s412 + $0xa8] sm:$0xff]
          %v1020 = vld [vmem:[%s412 + $0xb0] sm:$0xff]
          %v1021 = vld [vmem:[%s412 + $0xb8] sm:$0xff]
          %v1022 = vld [vmem:[%s412 + $0xc0] sm:$0xff]
          %v1023 = vld [vmem:[%s412 + $0xc8] sm:$0xff]
          %v1024 = vld [vmem:[%s412 + $0xd0] sm:$0xff]
          %v1025 = vld [vmem:[%s412 + $0xd8] sm:$0xff]
          %v1026 = vld [vmem:[%s412 + $0xe0] sm:$0xff]
          %v1027 = vld [vmem:[%s412 + $0xe8] sm:$0xff]
          %v1028 = vld [vmem:[%s412 + $0xf0] sm:$0xff]
          %v1029 = vld [vmem:[%s412 + $0xf8] sm:$0xff]
          %v1030 = vmul.f32 %v628, %v998
          %v1031 = vmul.f32 %v632, %v999
          %v1032 = vmul.f32 %v636, %v1000
          %v1033 = vmul.f32 %v640, %v1001
          %v1034 = vmul.f32 %v644, %v1002
          %v1035 = vmul.f32 %v648, %v1003
          %v1036 = vmul.f32 %v652, %v1004
          %v1037 = vmul.f32 %v656, %v1005
          %v1038 = vmul.f32 %v628, %v1006
          %v1039 = vmul.f32 %v632, %v1007
          %v1040 = vmul.f32 %v636, %v1008
          %v1041 = vmul.f32 %v640, %v1009
          %v1042 = vmul.f32 %v644, %v1010
          %v1043 = vmul.f32 %v648, %v1011
          %v1044 = vmul.f32 %v652, %v1012
          %v1045 = vmul.f32 %v656, %v1013
          %v1046 = vmul.f32 %v628, %v1014
          %v1047 = vmul.f32 %v632, %v1015
          %v1048 = vmul.f32 %v636, %v1016
          %v1049 = vmul.f32 %v640, %v1017
          %v1050 = vmul.f32 %v644, %v1018
          %v1051 = vmul.f32 %v648, %v1019
          %v1052 = vmul.f32 %v652, %v1020
          %v1053 = vmul.f32 %v656, %v1021
          %v1054 = vmul.f32 %v628, %v1022
          %v1055 = vmul.f32 %v632, %v1023
          %v1056 = vmul.f32 %v636, %v1024
          %v1057 = vmul.f32 %v640, %v1025
          %v1058 = vmul.f32 %v644, %v1026
          %v1059 = vmul.f32 %v648, %v1027
          %v1060 = vmul.f32 %v652, %v1028
          %v1061 = vmul.f32 %v656, %v1029
          %v1062 = vadd.f32 %v966, %v1030
          %v1063 = vadd.f32 %v967, %v1031
          %v1064 = vadd.f32 %v968, %v1032
          %v1065 = vadd.f32 %v969, %v1033
          %v1066 = vadd.f32 %v970, %v1034
          %v1067 = vadd.f32 %v971, %v1035
          %v1068 = vadd.f32 %v972, %v1036
          %v1069 = vadd.f32 %v973, %v1037
          %v1070 = vadd.f32 %v974, %v1038
          %v1071 = vadd.f32 %v975, %v1039
          %v1072 = vadd.f32 %v976, %v1040
          %v1073 = vadd.f32 %v977, %v1041
          %v1074 = vadd.f32 %v978, %v1042
          %v1075 = vadd.f32 %v979, %v1043
          %v1076 = vadd.f32 %v980, %v1044
          %v1077 = vadd.f32 %v981, %v1045
          %v1078 = vadd.f32 %v982, %v1046
          %v1079 = vadd.f32 %v983, %v1047
          %v1080 = vadd.f32 %v984, %v1048
          %v1081 = vadd.f32 %v985, %v1049
          %v1082 = vadd.f32 %v986, %v1050
          %v1083 = vadd.f32 %v987, %v1051
          %v1084 = vadd.f32 %v988, %v1052
          %v1085 = vadd.f32 %v989, %v1053
          %v1086 = vadd.f32 %v990, %v1054
          %v1087 = vadd.f32 %v991, %v1055
          %v1088 = vadd.f32 %v992, %v1056
          %v1089 = vadd.f32 %v993, %v1057
          %v1090 = vadd.f32 %v994, %v1058
          %v1091 = vadd.f32 %v995, %v1059
          %v1092 = vadd.f32 %v996, %v1060
          %v1093 = vadd.f32 %v997, %v1061
          %s1094 = smul.u32 %s478, 64
          %s1095 = sshra.s32 %s1094, 3
          %s1096 = sand.u32 %s1094, 7
          %s1097 = smul.u32 %s1095, 8
          %s1098 = smul.addr %s1097, 8
          %s1099 = scalar_lea.vmem %s180, %s1098 [#allocation6]
          %1100 = vst [vmem:[%s1099] sm:$0xff] %v1062
          %1101 = vst [vmem:[%s1099 + $0x8] sm:$0xff] %v1063
          %1102 = vst [vmem:[%s1099 + $0x10] sm:$0xff] %v1064
          %1103 = vst [vmem:[%s1099 + $0x18] sm:$0xff] %v1065
          %1104 = vst [vmem:[%s1099 + $0x20] sm:$0xff] %v1066
          %1105 = vst [vmem:[%s1099 + $0x28] sm:$0xff] %v1067
          %1106 = vst [vmem:[%s1099 + $0x30] sm:$0xff] %v1068
          %1107 = vst [vmem:[%s1099 + $0x38] sm:$0xff] %v1069
          %1108 = vst [vmem:[%s1099 + $0x40] sm:$0xff] %v1070
          %1109 = vst [vmem:[%s1099 + $0x48] sm:$0xff] %v1071
          %1110 = vst [vmem:[%s1099 + $0x50] sm:$0xff] %v1072
          %1111 = vst [vmem:[%s1099 + $0x58] sm:$0xff] %v1073
          %1112 = vst [vmem:[%s1099 + $0x60] sm:$0xff] %v1074
          %1113 = vst [vmem:[%s1099 + $0x68] sm:$0xff] %v1075
          %1114 = vst [vmem:[%s1099 + $0x70] sm:$0xff] %v1076
          %1115 = vst [vmem:[%s1099 + $0x78] sm:$0xff] %v1077
          %1116 = vst [vmem:[%s1099 + $0x80] sm:$0xff] %v1078
          %1117 = vst [vmem:[%s1099 + $0x88] sm:$0xff] %v1079
          %1118 = vst [vmem:[%s1099 + $0x90] sm:$0xff] %v1080
          %1119 = vst [vmem:[%s1099 + $0x98] sm:$0xff] %v1081
          %1120 = vst [vmem:[%s1099 + $0xa0] sm:$0xff] %v1082
          %1121 = vst [vmem:[%s1099 + $0xa8] sm:$0xff] %v1083
          %1122 = vst [vmem:[%s1099 + $0xb0] sm:$0xff] %v1084
          %1123 = vst [vmem:[%s1099 + $0xb8] sm:$0xff] %v1085
          %1124 = vst [vmem:[%s1099 + $0xc0] sm:$0xff] %v1086
          %1125 = vst [vmem:[%s1099 + $0xc8] sm:$0xff] %v1087
          %1126 = vst [vmem:[%s1099 + $0xd0] sm:$0xff] %v1088
          %1127 = vst [vmem:[%s1099 + $0xd8] sm:$0xff] %v1089
          %1128 = vst [vmem:[%s1099 + $0xe0] sm:$0xff] %v1090
          %1129 = vst [vmem:[%s1099 + $0xe8] sm:$0xff] %v1091
          %1130 = vst [vmem:[%s1099 + $0xf0] sm:$0xff] %v1092
          %1131 = vst [vmem:[%s1099 + $0xf8] sm:$0xff] %v1093
          %v1132 = vld [vmem:[#allocation2 + $0x100] sm:$0xff]
          %v1133 = vld [vmem:[#allocation2 + $0x108] sm:$0xff]
          %v1134 = vld [vmem:[#allocation2 + $0x110] sm:$0xff]
          %v1135 = vld [vmem:[#allocation2 + $0x118] sm:$0xff]
          %v1136 = vld [vmem:[#allocation2 + $0x120] sm:$0xff]
          %v1137 = vld [vmem:[#allocation2 + $0x128] sm:$0xff]
          %v1138 = vld [vmem:[#allocation2 + $0x130] sm:$0xff]
          %v1139 = vld [vmem:[#allocation2 + $0x138] sm:$0xff]
          %v1140 = vld [vmem:[#allocation2 + $0x140] sm:$0xff]
          %v1141 = vld [vmem:[#allocation2 + $0x148] sm:$0xff]
          %v1142 = vld [vmem:[#allocation2 + $0x150] sm:$0xff]
          %v1143 = vld [vmem:[#allocation2 + $0x158] sm:$0xff]
          %v1144 = vld [vmem:[#allocation2 + $0x160] sm:$0xff]
          %v1145 = vld [vmem:[#allocation2 + $0x168] sm:$0xff]
          %v1146 = vld [vmem:[#allocation2 + $0x170] sm:$0xff]
          %v1147 = vld [vmem:[#allocation2 + $0x178] sm:$0xff]
          %v1148 = vld [vmem:[#allocation2 + $0x180] sm:$0xff]
          %v1149 = vld [vmem:[#allocation2 + $0x188] sm:$0xff]
          %v1150 = vld [vmem:[#allocation2 + $0x190] sm:$0xff]
          %v1151 = vld [vmem:[#allocation2 + $0x198] sm:$0xff]
          %v1152 = vld [vmem:[#allocation2 + $0x1a0] sm:$0xff]
          %v1153 = vld [vmem:[#allocation2 + $0x1a8] sm:$0xff]
          %v1154 = vld [vmem:[#allocation2 + $0x1b0] sm:$0xff]
          %v1155 = vld [vmem:[#allocation2 + $0x1b8] sm:$0xff]
          %v1156 = vld [vmem:[#allocation2 + $0x1c0] sm:$0xff]
          %v1157 = vld [vmem:[#allocation2 + $0x1c8] sm:$0xff]
          %v1158 = vld [vmem:[#allocation2 + $0x1d0] sm:$0xff]
          %v1159 = vld [vmem:[#allocation2 + $0x1d8] sm:$0xff]
          %v1160 = vld [vmem:[#allocation2 + $0x1e0] sm:$0xff]
          %v1161 = vld [vmem:[#allocation2 + $0x1e8] sm:$0xff]
          %v1162 = vld [vmem:[#allocation2 + $0x1f0] sm:$0xff]
          %v1163 = vld [vmem:[#allocation2 + $0x1f8] sm:$0xff]
          %v1164 = vmul.f32 %v493, %v1132
          %v1165 = vmul.f32 %v497, %v1133
          %v1166 = vmul.f32 %v501, %v1134
          %v1167 = vmul.f32 %v505, %v1135
          %v1168 = vmul.f32 %v509, %v1136
          %v1169 = vmul.f32 %v513, %v1137
          %v1170 = vmul.f32 %v517, %v1138
          %v1171 = vmul.f32 %v521, %v1139
          %v1172 = vmul.f32 %v493, %v1140
          %v1173 = vmul.f32 %v497, %v1141
          %v1174 = vmul.f32 %v501, %v1142
          %v1175 = vmul.f32 %v505, %v1143
          %v1176 = vmul.f32 %v509, %v1144
          %v1177 = vmul.f32 %v513, %v1145
          %v1178 = vmul.f32 %v517, %v1146
          %v1179 = vmul.f32 %v521, %v1147
          %v1180 = vmul.f32 %v493, %v1148
          %v1181 = vmul.f32 %v497, %v1149
          %v1182 = vmul.f32 %v501, %v1150
          %v1183 = vmul.f32 %v505, %v1151
          %v1184 = vmul.f32 %v509, %v1152
          %v1185 = vmul.f32 %v513, %v1153
          %v1186 = vmul.f32 %v517, %v1154
          %v1187 = vmul.f32 %v521, %v1155
          %v1188 = vmul.f32 %v493, %v1156
          %v1189 = vmul.f32 %v497, %v1157
          %v1190 = vmul.f32 %v501, %v1158
          %v1191 = vmul.f32 %v505, %v1159
          %v1192 = vmul.f32 %v509, %v1160
          %v1193 = vmul.f32 %v513, %v1161
          %v1194 = vmul.f32 %v517, %v1162
          %v1195 = vmul.f32 %v521, %v1163
          %v1196 = vadd.f32 %v1164, %v673
          %v1197 = vadd.f32 %v1165, %v677
          %v1198 = vadd.f32 %v1166, %v681
          %v1199 = vadd.f32 %v1167, %v685
          %v1200 = vadd.f32 %v1168, %v689
          %v1201 = vadd.f32 %v1169, %v693
          %v1202 = vadd.f32 %v1170, %v697
          %v1203 = vadd.f32 %v1171, %v701
          %v1204 = vadd.f32 %v1172, %v673
          %v1205 = vadd.f32 %v1173, %v677
          %v1206 = vadd.f32 %v1174, %v681
          %v1207 = vadd.f32 %v1175, %v685
          %v1208 = vadd.f32 %v1176, %v689
          %v1209 = vadd.f32 %v1177, %v693
          %v1210 = vadd.f32 %v1178, %v697
          %v1211 = vadd.f32 %v1179, %v701
          %v1212 = vadd.f32 %v1180, %v673
          %v1213 = vadd.f32 %v1181, %v677
          %v1214 = vadd.f32 %v1182, %v681
          %v1215 = vadd.f32 %v1183, %v685
          %v1216 = vadd.f32 %v1184, %v689
          %v1217 = vadd.f32 %v1185, %v693
          %v1218 = vadd.f32 %v1186, %v697
          %v1219 = vadd.f32 %v1187, %v701
          %v1220 = vadd.f32 %v1188, %v673
          %v1221 = vadd.f32 %v1189, %v677
          %v1222 = vadd.f32 %v1190, %v681
          %v1223 = vadd.f32 %v1191, %v685
          %v1224 = vadd.f32 %v1192, %v689
          %v1225 = vadd.f32 %v1193, %v693
          %v1226 = vadd.f32 %v1194, %v697
          %v1227 = vadd.f32 %v1195, %v701
          %v1228 = vld [vmem:[%s264 + $0x100] sm:$0xff]
          %v1229 = vld [vmem:[%s264 + $0x108] sm:$0xff]
          %v1230 = vld [vmem:[%s264 + $0x110] sm:$0xff]
          %v1231 = vld [vmem:[%s264 + $0x118] sm:$0xff]
          %v1232 = vld [vmem:[%s264 + $0x120] sm:$0xff]
          %v1233 = vld [vmem:[%s264 + $0x128] sm:$0xff]
          %v1234 = vld [vmem:[%s264 + $0x130] sm:$0xff]
          %v1235 = vld [vmem:[%s264 + $0x138] sm:$0xff]
          %v1236 = vld [vmem:[%s264 + $0x140] sm:$0xff]
          %v1237 = vld [vmem:[%s264 + $0x148] sm:$0xff]
          %v1238 = vld [vmem:[%s264 + $0x150] sm:$0xff]
          %v1239 = vld [vmem:[%s264 + $0x158] sm:$0xff]
          %v1240 = vld [vmem:[%s264 + $0x160] sm:$0xff]
          %v1241 = vld [vmem:[%s264 + $0x168] sm:$0xff]
          %v1242 = vld [vmem:[%s264 + $0x170] sm:$0xff]
          %v1243 = vld [vmem:[%s264 + $0x178] sm:$0xff]
          %v1244 = vld [vmem:[%s264 + $0x180] sm:$0xff]
          %v1245 = vld [vmem:[%s264 + $0x188] sm:$0xff]
          %v1246 = vld [vmem:[%s264 + $0x190] sm:$0xff]
          %v1247 = vld [vmem:[%s264 + $0x198] sm:$0xff]
          %v1248 = vld [vmem:[%s264 + $0x1a0] sm:$0xff]
          %v1249 = vld [vmem:[%s264 + $0x1a8] sm:$0xff]
          %v1250 = vld [vmem:[%s264 + $0x1b0] sm:$0xff]
          %v1251 = vld [vmem:[%s264 + $0x1b8] sm:$0xff]
          %v1252 = vld [vmem:[%s264 + $0x1c0] sm:$0xff]
          %v1253 = vld [vmem:[%s264 + $0x1c8] sm:$0xff]
          %v1254 = vld [vmem:[%s264 + $0x1d0] sm:$0xff]
          %v1255 = vld [vmem:[%s264 + $0x1d8] sm:$0xff]
          %v1256 = vld [vmem:[%s264 + $0x1e0] sm:$0xff]
          %v1257 = vld [vmem:[%s264 + $0x1e8] sm:$0xff]
          %v1258 = vld [vmem:[%s264 + $0x1f0] sm:$0xff]
          %v1259 = vld [vmem:[%s264 + $0x1f8] sm:$0xff]
          %v1260 = vmul.f32 %v538, %v1228
          %v1261 = vmul.f32 %v542, %v1229
          %v1262 = vmul.f32 %v546, %v1230
          %v1263 = vmul.f32 %v550, %v1231
          %v1264 = vmul.f32 %v554, %v1232
          %v1265 = vmul.f32 %v558, %v1233
          %v1266 = vmul.f32 %v562, %v1234
          %v1267 = vmul.f32 %v566, %v1235
          %v1268 = vmul.f32 %v538, %v1236
          %v1269 = vmul.f32 %v542, %v1237
          %v1270 = vmul.f32 %v546, %v1238
          %v1271 = vmul.f32 %v550, %v1239
          %v1272 = vmul.f32 %v554, %v1240
          %v1273 = vmul.f32 %v558, %v1241
          %v1274 = vmul.f32 %v562, %v1242
          %v1275 = vmul.f32 %v566, %v1243
          %v1276 = vmul.f32 %v538, %v1244
          %v1277 = vmul.f32 %v542, %v1245
          %v1278 = vmul.f32 %v546, %v1246
          %v1279 = vmul.f32 %v550, %v1247
          %v1280 = vmul.f32 %v554, %v1248
          %v1281 = vmul.f32 %v558, %v1249
          %v1282 = vmul.f32 %v562, %v1250
          %v1283 = vmul.f32 %v566, %v1251
          %v1284 = vmul.f32 %v538, %v1252
          %v1285 = vmul.f32 %v542, %v1253
          %v1286 = vmul.f32 %v546, %v1254
          %v1287 = vmul.f32 %v550, %v1255
          %v1288 = vmul.f32 %v554, %v1256
          %v1289 = vmul.f32 %v558, %v1257
          %v1290 = vmul.f32 %v562, %v1258
          %v1291 = vmul.f32 %v566, %v1259
          %v1292 = vadd.f32 %v1196, %v1260
          %v1293 = vadd.f32 %v1197, %v1261
          %v1294 = vadd.f32 %v1198, %v1262
          %v1295 = vadd.f32 %v1199, %v1263
          %v1296 = vadd.f32 %v1200, %v1264
          %v1297 = vadd.f32 %v1201, %v1265
          %v1298 = vadd.f32 %v1202, %v1266
          %v1299 = vadd.f32 %v1203, %v1267
          %v1300 = vadd.f32 %v1204, %v1268
          %v1301 = vadd.f32 %v1205, %v1269
          %v1302 = vadd.f32 %v1206, %v1270
          %v1303 = vadd.f32 %v1207, %v1271
          %v1304 = vadd.f32 %v1208, %v1272
          %v1305 = vadd.f32 %v1209, %v1273
          %v1306 = vadd.f32 %v1210, %v1274
          %v1307 = vadd.f32 %v1211, %v1275
          %v1308 = vadd.f32 %v1212, %v1276
          %v1309 = vadd.f32 %v1213, %v1277
          %v1310 = vadd.f32 %v1214, %v1278
          %v1311 = vadd.f32 %v1215, %v1279
          %v1312 = vadd.f32 %v1216, %v1280
          %v1313 = vadd.f32 %v1217, %v1281
          %v1314 = vadd.f32 %v1218, %v1282
          %v1315 = vadd.f32 %v1219, %v1283
          %v1316 = vadd.f32 %v1220, %v1284
          %v1317 = vadd.f32 %v1221, %v1285
          %v1318 = vadd.f32 %v1222, %v1286
          %v1319 = vadd.f32 %v1223, %v1287
          %v1320 = vadd.f32 %v1224, %v1288
          %v1321 = vadd.f32 %v1225, %v1289
          %v1322 = vadd.f32 %v1226, %v1290
          %v1323 = vadd.f32 %v1227, %v1291
          %v1324 = vld [vmem:[%s338 + $0x100] sm:$0xff]
          %v1325 = vld [vmem:[%s338 + $0x108] sm:$0xff]
          %v1326 = vld [vmem:[%s338 + $0x110] sm:$0xff]
          %v1327 = vld [vmem:[%s338 + $0x118] sm:$0xff]
          %v1328 = vld [vmem:[%s338 + $0x120] sm:$0xff]
          %v1329 = vld [vmem:[%s338 + $0x128] sm:$0xff]
          %v1330 = vld [vmem:[%s338 + $0x130] sm:$0xff]
          %v1331 = vld [vmem:[%s338 + $0x138] sm:$0xff]
          %v1332 = vld [vmem:[%s338 + $0x140] sm:$0xff]
          %v1333 = vld [vmem:[%s338 + $0x148] sm:$0xff]
          %v1334 = vld [vmem:[%s338 + $0x150] sm:$0xff]
          %v1335 = vld [vmem:[%s338 + $0x158] sm:$0xff]
          %v1336 = vld [vmem:[%s338 + $0x160] sm:$0xff]
          %v1337 = vld [vmem:[%s338 + $0x168] sm:$0xff]
          %v1338 = vld [vmem:[%s338 + $0x170] sm:$0xff]
          %v1339 = vld [vmem:[%s338 + $0x178] sm:$0xff]
          %v1340 = vld [vmem:[%s338 + $0x180] sm:$0xff]
          %v1341 = vld [vmem:[%s338 + $0x188] sm:$0xff]
          %v1342 = vld [vmem:[%s338 + $0x190] sm:$0xff]
          %v1343 = vld [vmem:[%s338 + $0x198] sm:$0xff]
          %v1344 = vld [vmem:[%s338 + $0x1a0] sm:$0xff]
          %v1345 = vld [vmem:[%s338 + $0x1a8] sm:$0xff]
          %v1346 = vld [vmem:[%s338 + $0x1b0] sm:$0xff]
          %v1347 = vld [vmem:[%s338 + $0x1b8] sm:$0xff]
          %v1348 = vld [vmem:[%s338 + $0x1c0] sm:$0xff]
          %v1349 = vld [vmem:[%s338 + $0x1c8] sm:$0xff]
          %v1350 = vld [vmem:[%s338 + $0x1d0] sm:$0xff]
          %v1351 = vld [vmem:[%s338 + $0x1d8] sm:$0xff]
          %v1352 = vld [vmem:[%s338 + $0x1e0] sm:$0xff]
          %v1353 = vld [vmem:[%s338 + $0x1e8] sm:$0xff]
          %v1354 = vld [vmem:[%s338 + $0x1f0] sm:$0xff]
          %v1355 = vld [vmem:[%s338 + $0x1f8] sm:$0xff]
          %v1356 = vmul.f32 %v583, %v1324
          %v1357 = vmul.f32 %v587, %v1325
          %v1358 = vmul.f32 %v591, %v1326
          %v1359 = vmul.f32 %v595, %v1327
          %v1360 = vmul.f32 %v599, %v1328
          %v1361 = vmul.f32 %v603, %v1329
          %v1362 = vmul.f32 %v607, %v1330
          %v1363 = vmul.f32 %v611, %v1331
          %v1364 = vmul.f32 %v583, %v1332
          %v1365 = vmul.f32 %v587, %v1333
          %v1366 = vmul.f32 %v591, %v1334
          %v1367 = vmul.f32 %v595, %v1335
          %v1368 = vmul.f32 %v599, %v1336
          %v1369 = vmul.f32 %v603, %v1337
          %v1370 = vmul.f32 %v607, %v1338
          %v1371 = vmul.f32 %v611, %v1339
          %v1372 = vmul.f32 %v583, %v1340
          %v1373 = vmul.f32 %v587, %v1341
          %v1374 = vmul.f32 %v591, %v1342
          %v1375 = vmul.f32 %v595, %v1343
          %v1376 = vmul.f32 %v599, %v1344
          %v1377 = vmul.f32 %v603, %v1345
          %v1378 = vmul.f32 %v607, %v1346
          %v1379 = vmul.f32 %v611, %v1347
          %v1380 = vmul.f32 %v583, %v1348
          %v1381 = vmul.f32 %v587, %v1349
          %v1382 = vmul.f32 %v591, %v1350
          %v1383 = vmul.f32 %v595, %v1351
          %v1384 = vmul.f32 %v599, %v1352
          %v1385 = vmul.f32 %v603, %v1353
          %v1386 = vmul.f32 %v607, %v1354
          %v1387 = vmul.f32 %v611, %v1355
          %v1388 = vadd.f32 %v1292, %v1356
          %v1389 = vadd.f32 %v1293, %v1357
          %v1390 = vadd.f32 %v1294, %v1358
          %v1391 = vadd.f32 %v1295, %v1359
          %v1392 = vadd.f32 %v1296, %v1360
          %v1393 = vadd.f32 %v1297, %v1361
          %v1394 = vadd.f32 %v1298, %v1362
          %v1395 = vadd.f32 %v1299, %v1363
          %v1396 = vadd.f32 %v1300, %v1364
          %v1397 = vadd.f32 %v1301, %v1365
          %v1398 = vadd.f32 %v1302, %v1366
          %v1399 = vadd.f32 %v1303, %v1367
          %v1400 = vadd.f32 %v1304, %v1368
          %v1401 = vadd.f32 %v1305, %v1369
          %v1402 = vadd.f32 %v1306, %v1370
          %v1403 = vadd.f32 %v1307, %v1371
          %v1404 = vadd.f32 %v1308, %v1372
          %v1405 = vadd.f32 %v1309, %v1373
          %v1406 = vadd.f32 %v1310, %v1374
          %v1407 = vadd.f32 %v1311, %v1375
          %v1408 = vadd.f32 %v1312, %v1376
          %v1409 = vadd.f32 %v1313, %v1377
          %v1410 = vadd.f32 %v1314, %v1378
          %v1411 = vadd.f32 %v1315, %v1379
          %v1412 = vadd.f32 %v1316, %v1380
          %v1413 = vadd.f32 %v1317, %v1381
          %v1414 = vadd.f32 %v1318, %v1382
          %v1415 = vadd.f32 %v1319, %v1383
          %v1416 = vadd.f32 %v1320, %v1384
          %v1417 = vadd.f32 %v1321, %v1385
          %v1418 = vadd.f32 %v1322, %v1386
          %v1419 = vadd.f32 %v1323, %v1387
          %v1420 = vld [vmem:[%s412 + $0x100] sm:$0xff]
          %v1421 = vld [vmem:[%s412 + $0x108] sm:$0xff]
          %v1422 = vld [vmem:[%s412 + $0x110] sm:$0xff]
          %v1423 = vld [vmem:[%s412 + $0x118] sm:$0xff]
          %v1424 = vld [vmem:[%s412 + $0x120] sm:$0xff]
          %v1425 = vld [vmem:[%s412 + $0x128] sm:$0xff]
          %v1426 = vld [vmem:[%s412 + $0x130] sm:$0xff]
          %v1427 = vld [vmem:[%s412 + $0x138] sm:$0xff]
          %v1428 = vld [vmem:[%s412 + $0x140] sm:$0xff]
          %v1429 = vld [vmem:[%s412 + $0x148] sm:$0xff]
          %v1430 = vld [vmem:[%s412 + $0x150] sm:$0xff]
          %v1431 = vld [vmem:[%s412 + $0x158] sm:$0xff]
          %v1432 = vld [vmem:[%s412 + $0x160] sm:$0xff]
          %v1433 = vld [vmem:[%s412 + $0x168] sm:$0xff]
          %v1434 = vld [vmem:[%s412 + $0x170] sm:$0xff]
          %v1435 = vld [vmem:[%s412 + $0x178] sm:$0xff]
          %v1436 = vld [vmem:[%s412 + $0x180] sm:$0xff]
          %v1437 = vld [vmem:[%s412 + $0x188] sm:$0xff]
          %v1438 = vld [vmem:[%s412 + $0x190] sm:$0xff]
          %v1439 = vld [vmem:[%s412 + $0x198] sm:$0xff]
          %v1440 = vld [vmem:[%s412 + $0x1a0] sm:$0xff]
          %v1441 = vld [vmem:[%s412 + $0x1a8] sm:$0xff]
          %v1442 = vld [vmem:[%s412 + $0x1b0] sm:$0xff]
          %v1443 = vld [vmem:[%s412 + $0x1b8] sm:$0xff]
          %v1444 = vld [vmem:[%s412 + $0x1c0] sm:$0xff]
          %v1445 = vld [vmem:[%s412 + $0x1c8] sm:$0xff]
          %v1446 = vld [vmem:[%s412 + $0x1d0] sm:$0xff]
          %v1447 = vld [vmem:[%s412 + $0x1d8] sm:$0xff]
          %v1448 = vld [vmem:[%s412 + $0x1e0] sm:$0xff]
          %v1449 = vld [vmem:[%s412 + $0x1e8] sm:$0xff]
          %v1450 = vld [vmem:[%s412 + $0x1f0] sm:$0xff]
          %v1451 = vld [vmem:[%s412 + $0x1f8] sm:$0xff]
          %v1452 = vmul.f32 %v628, %v1420
          %v1453 = vmul.f32 %v632, %v1421
          %v1454 = vmul.f32 %v636, %v1422
          %v1455 = vmul.f32 %v640, %v1423
          %v1456 = vmul.f32 %v644, %v1424
          %v1457 = vmul.f32 %v648, %v1425
          %v1458 = vmul.f32 %v652, %v1426
          %v1459 = vmul.f32 %v656, %v1427
          %v1460 = vmul.f32 %v628, %v1428
          %v1461 = vmul.f32 %v632, %v1429
          %v1462 = vmul.f32 %v636, %v1430
          %v1463 = vmul.f32 %v640, %v1431
          %v1464 = vmul.f32 %v644, %v1432
          %v1465 = vmul.f32 %v648, %v1433
          %v1466 = vmul.f32 %v652, %v1434
          %v1467 = vmul.f32 %v656, %v1435
          %v1468 = vmul.f32 %v628, %v1436
          %v1469 = vmul.f32 %v632, %v1437
          %v1470 = vmul.f32 %v636, %v1438
          %v1471 = vmul.f32 %v640, %v1439
          %v1472 = vmul.f32 %v644, %v1440
          %v1473 = vmul.f32 %v648, %v1441
          %v1474 = vmul.f32 %v652, %v1442
          %v1475 = vmul.f32 %v656, %v1443
          %v1476 = vmul.f32 %v628, %v1444
          %v1477 = vmul.f32 %v632, %v1445
          %v1478 = vmul.f32 %v636, %v1446
          %v1479 = vmul.f32 %v640, %v1447
          %v1480 = vmul.f32 %v644, %v1448
          %v1481 = vmul.f32 %v648, %v1449
          %v1482 = vmul.f32 %v652, %v1450
          %v1483 = vmul.f32 %v656, %v1451
          %v1484 = vadd.f32 %v1388, %v1452
          %v1485 = vadd.f32 %v1389, %v1453
          %v1486 = vadd.f32 %v1390, %v1454
          %v1487 = vadd.f32 %v1391, %v1455
          %v1488 = vadd.f32 %v1392, %v1456
          %v1489 = vadd.f32 %v1393, %v1457
          %v1490 = vadd.f32 %v1394, %v1458
          %v1491 = vadd.f32 %v1395, %v1459
          %v1492 = vadd.f32 %v1396, %v1460
          %v1493 = vadd.f32 %v1397, %v1461
          %v1494 = vadd.f32 %v1398, %v1462
          %v1495 = vadd.f32 %v1399, %v1463
          %v1496 = vadd.f32 %v1400, %v1464
          %v1497 = vadd.f32 %v1401, %v1465
          %v1498 = vadd.f32 %v1402, %v1466
          %v1499 = vadd.f32 %v1403, %v1467
          %v1500 = vadd.f32 %v1404, %v1468
          %v1501 = vadd.f32 %v1405, %v1469
          %v1502 = vadd.f32 %v1406, %v1470
          %v1503 = vadd.f32 %v1407, %v1471
          %v1504 = vadd.f32 %v1408, %v1472
          %v1505 = vadd.f32 %v1409, %v1473
          %v1506 = vadd.f32 %v1410, %v1474
          %v1507 = vadd.f32 %v1411, %v1475
          %v1508 = vadd.f32 %v1412, %v1476
          %v1509 = vadd.f32 %v1413, %v1477
          %v1510 = vadd.f32 %v1414, %v1478
          %v1511 = vadd.f32 %v1415, %v1479
          %v1512 = vadd.f32 %v1416, %v1480
          %v1513 = vadd.f32 %v1417, %v1481
          %v1514 = vadd.f32 %v1418, %v1482
          %v1515 = vadd.f32 %v1419, %v1483
          %s1516 = sadd.s32 %s1094, 32
          %s1517 = sshra.s32 %s1516, 3
          %s1518 = sand.u32 %s1516, 7
          %s1519 = smul.u32 %s1517, 8
          %s1520 = smul.addr %s1519, 8
          %s1521 = scalar_lea.vmem %s180, %s1520 [#allocation6]
          %1522 = vst [vmem:[%s1521] sm:$0xff] %v1484
          %1523 = vst [vmem:[%s1521 + $0x8] sm:$0xff] %v1485
          %1524 = vst [vmem:[%s1521 + $0x10] sm:$0xff] %v1486
          %1525 = vst [vmem:[%s1521 + $0x18] sm:$0xff] %v1487
          %1526 = vst [vmem:[%s1521 + $0x20] sm:$0xff] %v1488
          %1527 = vst [vmem:[%s1521 + $0x28] sm:$0xff] %v1489
          %1528 = vst [vmem:[%s1521 + $0x30] sm:$0xff] %v1490
          %1529 = vst [vmem:[%s1521 + $0x38] sm:$0xff] %v1491
          %1530 = vst [vmem:[%s1521 + $0x40] sm:$0xff] %v1492
          %1531 = vst [vmem:[%s1521 + $0x48] sm:$0xff] %v1493
          %1532 = vst [vmem:[%s1521 + $0x50] sm:$0xff] %v1494
          %1533 = vst [vmem:[%s1521 + $0x58] sm:$0xff] %v1495
          %1534 = vst [vmem:[%s1521 + $0x60] sm:$0xff] %v1496
          %1535 = vst [vmem:[%s1521 + $0x68] sm:$0xff] %v1497
          %1536 = vst [vmem:[%s1521 + $0x70] sm:$0xff] %v1498
          %1537 = vst [vmem:[%s1521 + $0x78] sm:$0xff] %v1499
          %1538 = vst [vmem:[%s1521 + $0x80] sm:$0xff] %v1500
          %1539 = vst [vmem:[%s1521 + $0x88] sm:$0xff] %v1501
          %1540 = vst [vmem:[%s1521 + $0x90] sm:$0xff] %v1502
          %1541 = vst [vmem:[%s1521 + $0x98] sm:$0xff] %v1503
          %1542 = vst [vmem:[%s1521 + $0xa0] sm:$0xff] %v1504
          %1543 = vst [vmem:[%s1521 + $0xa8] sm:$0xff] %v1505
          %1544 = vst [vmem:[%s1521 + $0xb0] sm:$0xff] %v1506
          %1545 = vst [vmem:[%s1521 + $0xb8] sm:$0xff] %v1507
          %1546 = vst [vmem:[%s1521 + $0xc0] sm:$0xff] %v1508
          %1547 = vst [vmem:[%s1521 + $0xc8] sm:$0xff] %v1509
          %1548 = vst [vmem:[%s1521 + $0xd0] sm:$0xff] %v1510
          %1549 = vst [vmem:[%s1521 + $0xd8] sm:$0xff] %v1511
          %1550 = vst [vmem:[%s1521 + $0xe0] sm:$0xff] %v1512
          %1551 = vst [vmem:[%s1521 + $0xe8] sm:$0xff] %v1513
          %1552 = vst [vmem:[%s1521 + $0xf0] sm:$0xff] %v1514
          %1553 = vst [vmem:[%s1521 + $0xf8] sm:$0xff] %v1515
        $region37: #{forward.1} parent=27 // loop_footer
          %s482 = sadd.s32 1, %s478
        $region38: #{forward.1} parent=27 // loop_footer_branch
          %477 = sbr.rel target = $region34
        $region39: #{forward.1} parent=27 // loop_exit
          _
        %s1554 = sand.u32 %s90, 1
        %s1555 = scalar_lea.sflag [#allocation5], %s1554
        %s1556 = sand.u32 %s90, 1
        %s1557 = smul.addr %s1556, 8192
        %s1558 = scalar_lea.vmem [#allocation6], %s1557
        // Predicated region
        $region40: #{forward.1} parent=27 // pred_check
          %p1559 = pneg %p100
        $region41: #{forward.1} parent=27 // pred_check_branch
          %1561 = sbr.rel (%p1559) target = $region43
        $region42: #{forward.1} parent=27 // pred_region
          %s1562 = smul.u32 128, %s24
          %s1564 = ssub.s32 131072, 131072
          %1565 = vsyncadd %s1555, %s1564
          %s1566 = smul.addr %s1562, 8
          %s1567 = smul.addr %s23, 1024
          %s1568 = sadd.s32 %s1566, %s1567
          %s1569 = smul.addr %s1568, 128
          %s1570 = scalar_lea.hbm %s2, %s1569
          %s1571 = sshll.u32 %s1558, 4
          %s1572 = int_to_ptr.vmem [resolvable:$true] %s1571
          %1577 = dma.vmem_to_hbm [thread:$0]  %s1572, 131072, %s1570, %s1555, 1024, 1024, 64
        $region43: #{forward.1} parent=27 // pred_fallthru
          _
      $region28: #{forward.1} parent=5 // pred_fallthru
        _
      %p1578 = scmp.le.s32.totalorder 2, %s14
      // Predicated region
      $region44: #{forward.1} parent=5 // pred_check
        %p1579 = pneg %p1578
      $region45: #{forward.1} parent=5 // pred_check_branch
        %1581 = sbr.rel (%p1579) target = $region47
      $region46: #{forward.1} parent=5 // pred_region
        %s1582 = ssub.s32 %s14, 2
        // Predicated region
        $region48: #{forward.1} parent=46 // pred_check
          %p1583 = pneg %p106
        $region49: #{forward.1} parent=46 // pred_check_branch
          %1585 = sbr.rel (%p1583) target = $region51
        $region50: #{forward.1} parent=46 // pred_region
          %s1586 = sand.u32 %s91, 1
          %s1587 = scalar_lea.sflag [#allocation5], %s1586
          %s1588 = sand.u32 %s91, 1
          %s1589 = smul.addr %s1588, 8192
          %s1590 = scalar_lea.vmem [#allocation6], %s1589
          %1591 = dma.done %s1587, 131072
        $region51: #{forward.1} parent=46 // pred_fallthru
          _
      $region47: #{forward.1} parent=5 // pred_fallthru
        _
    $region6: #{forward.1} parent=1 // loop_footer
      %s18 = sadd.s32 1, %s14
    $region7: #{forward.1} parent=1 // loop_footer_branch
      %13 = sbr.rel target = $region3
    $region8: #{forward.1} parent=1 // loop_exit
      _
    %1592 = vsyncpa [#allocation4], 1
    %s1593 = scalar_lea.sflag [#allocation4], 1
    %1594 = vsyncpa %s1593, 1
    %1595 = vsyncpa [#allocation5], 1
    %s1596 = scalar_lea.sflag [#allocation5], 1
    %1597 = vsyncpa %s1596, 1

</llo_original>
